<compile_context>
chip_gen: v7x
topology: tpu7x:2x2x1
jax: 0.10.0
libtpu: 0.0.40
codegen_flags: <defaults>
</compile_context>

<pallas_src>
import functools
import math

import jax
import jax.numpy as jnp
from jax.experimental import pallas as pl
from jax.experimental.pallas import tpu as pltpu

NUM_BITS = 8     # args.num_bits in the original script
EMB_DIM = 32     # emb_dim
D = EMB_DIM
PACK = 4                      # feature vectors per 128-lane vreg row
LANES = PACK * EMB_DIM        # 128
BIT_LANES = PACK * NUM_BITS   # 32


# ----------------------------------------------------------------------------
# helpers
# ----------------------------------------------------------------------------
def _gelu_exact(x):
    # PyTorch nn.GELU() is the erf form: 0.5*x*(1+erf(x/sqrt(2))).
    # erf via the Abramowitz-Stegun 7.1.26 polynomial (|abs err| < 1.5e-7):
    # only exp/div/where needed, which lower cleanly on Mosaic.
    z = x * 0.7071067811865476
    az = jnp.abs(z)
    t = 1.0 / (1.0 + 0.3275911 * az)
    poly = ((((1.061405429 * t - 1.453152027) * t + 1.421413741) * t
             - 0.284496736) * t + 0.254829592) * t
    erf_abs = 1.0 - poly * jnp.exp(-az * az)
    erf = jnp.where(z < 0.0, -erf_abs, erf_abs)
    return 0.5 * x * (1.0 + erf)


def _round_up(x, m):
    return -(-x // m) * m


def _bitrev_perm(n):
    """Bit-reversal permutation of range(n); n must be a power of two."""
    bits = n.bit_length() - 1
    out = []
    for k in range(n):
        r = 0
        for t in range(bits):
            r = (r << 1) | ((k >> t) & 1)
        out.append(r)
    return out


def _choose_tile_g(num_graphs, per_group, max_rows=8192):
    """Graphs per grid block (always a multiple of 4 for the 4-lane packing).

    `max_rows` caps logical rows per block so the per-block live set
    (activations + merged-gate tensor, ~1.5 KB / logical row in f32) stays well
    inside the scoped-VMEM budget below — also covers v7x's 64 MiB physical
    VMEM.  When there is more than one block's worth of graphs we emit >= 2
    blocks so the "parallel" grid axis can use both v7x TensorCores.
    """
    # TODO(synk): groups with per_group >> max_rows still hold the whole group
    # in VMEM; a chunked/pipelined tree would be needed for very large groups.
    cap = max(PACK, (max_rows // max(per_group, 1)) // PACK * PACK)
    if num_graphs <= PACK:
        return PACK
    two_way = _round_up(_round_up(num_graphs, 2) // 2, PACK)
    return max(PACK, min(cap, two_way))


# ----------------------------------------------------------------------------
# fused kernel: encoder -> binary-tree GRU reduction -> decoder
# ----------------------------------------------------------------------------
def _fused_lcm_kernel(x_ref, dw_ref, db_ref, wg_ref, bg_ref,
                      w2_ref, b2_ref, w3_ref, b3_ref, o_ref, *,
                      per_group, t4):
    P = LANES  # 128 lanes = 4 packed feature vectors

    # ---- encoder: (BitwiseEmbedding o Linear) folded, then GELU -------------
    xb = x_ref[0].astype(jnp.float32).astype(jnp.bfloat16)       # (rows_p, 32)
    arr = _gelu_exact(
        jnp.dot(xb, dw_ref[...], preferred_element_type=jnp.float32)
        + db_ref[...])                                            # (rows_p, 128) f32

    wg = wg_ref[...]   # (128, 768) bf16, column groups [r_x|z_x|n_x|r_h|z_h|n_h]
    bg = bg_ref[...]   # (1, 768) f32, folded gate biases

    def cell(gx, gh, h_prev):
        # torch.nn.GRUCell semantics; r/z biases pre-folded into the x columns,
        # n-gate hidden bias kept on the h columns (inside the r-gate product).
        rg = jax.nn.sigmoid(gx[:, 0:P] + gh[:, 3 * P:4 * P])
        zg = jax.nn.sigmoid(gx[:, P:2 * P] + gh[:, 4 * P:5 * P])
        ng = jnp.tanh(gx[:, 2 * P:3 * P] + rg * gh[:, 5 * P:6 * P])
        return ng + zg * (h_prev - ng)          # == (1 - z) * n + z * h

    # ---- binary-tree reduction ----------------------------------------------
    # packed row = k * t4 + p holds tree-slot k of graphs 4p..4p+3.
    # Contiguous half-pairing here == pyg's adjacent pairing because the
    # wrapper bit-reverses the element order (power-of-two groups).
    n = per_group
    while n > 1:
        half = n // 2
        mp = half * t4
        left = arr[0:mp]
        right = arr[mp:2 * mp]
        x2 = arr[0:2 * mp].astype(jnp.bfloat16)   # contiguous [left ; right]
        # ONE merged gate matmul per level (bf16 in, f32 accumulate).
        g = jnp.dot(x2, wg, preferred_element_type=jnp.float32) + bg
        gl, gr = g[0:mp], g[mp:2 * mp]
        # symmetric binary op: (GRUCell(l, r) + GRUCell(r, l)) / 2
        out = 0.5 * (cell(gl, gr, right) + cell(gr, gl, left))
        if n % 2 == 1:
            # Non-power-of-two groups only: carry the last element forward.
            # TODO(synk): concat materializes a copy; only hit for odd levels.
            out = jnp.concatenate([out, arr[(n - 1) * t4:n * t4]], axis=0)
            n = half + 1
        else:
            n = half
        arr = out

    pooled = arr                                   # (t4, 128)

    # ---- decoder: Linear -> GELU -> (Dropout = id) -> Linear ----------------
    h2 = _gelu_exact(
        jnp.dot(pooled.astype(jnp.bfloat16), w2_ref[...],
                preferred_element_type=jnp.float32) + b2_ref[...])
    o_ref[0] = jnp.dot(h2.astype(jnp.bfloat16), w3_ref[...],
                       preferred_element_type=jnp.float32) + b3_ref[...]


# ----------------------------------------------------------------------------
# wrapper
# ----------------------------------------------------------------------------
def lcm_forward(x_bits, batch, params, num_graphs, per_group):
    # TODO(synk): to_dense_batch is specialized to contiguous equal-size groups
    # (no padding mask), matching the deterministic `batch` built below.
    del batch

    tile_g = _choose_tile_g(num_graphs, per_group)
    num_blocks = -(-num_graphs // tile_g)
    padded_graphs = num_blocks * tile_g
    t4 = tile_g // PACK
    rows_p = per_group * t4

    x = x_bits
    if padded_graphs != num_graphs:
        pad = jnp.zeros(((padded_graphs - num_graphs) * per_group, NUM_BITS),
                        x.dtype)
        x = jnp.concatenate([x, pad], axis=0)

    # [block, graph-in-block, element, bit]
    x4 = x.reshape(num_blocks, tile_g, per_group, NUM_BITS)
    if per_group > 1 and (per_group & (per_group - 1)) == 0:
        # Bit-reverse the element axis: the kernel's contiguous half-pairing
        # then reproduces pyg LCMAggregation's adjacent (2i, 2i+1) pairing.
        perm = jnp.asarray(_bitrev_perm(per_group), dtype=jnp.int32)
        x4 = x4[:, :, perm, :]
    # TODO(synk): non-power-of-two group sizes fall back to half-pairing with a
    # carried last element, which may associate differently than pyg.

    # element-major + 4-lane packing:
    #   packed row = k*(tile_g/4) + p, lane = 8*j + b  (graph = 4p + j).
    x_packed = (jnp.transpose(x4, (0, 2, 1, 3))
                .reshape(num_blocks, per_group, t4, BIT_LANES)
                .reshape(num_blocks, rows_p, BIT_LANES))

    def _w_spec(shape):
        nd = len(shape)
        return pl.BlockSpec(shape, lambda i, _nd=nd: (0,) * _nd)

    kern = functools.partial(_fused_lcm_kernel, per_group=per_group, t4=t4)

    out = pl.pallas_call(
        kern,
        out_shape=jax.ShapeDtypeStruct((num_blocks, t4, BIT_LANES),
                                       jnp.float32),
        grid=(num_blocks,),
        in_specs=[pl.BlockSpec((1, rows_p, BIT_LANES), lambda i: (i, 0, 0)),
                  _w_spec(params["dw_bd"].shape), _w_spec(params["db_p"].shape),
                  _w_spec(params["wg_bd"].shape), _w_spec(params["bg_p"].shape),
                  _w_spec(params["w2_bd"].shape), _w_spec(params["b2_p"].shape),
                  _w_spec(params["w3_bd"].shape), _w_spec(params["b3_p"].shape)],
        out_specs=pl.BlockSpec((1, t4, BIT_LANES), lambda i: (i, 0, 0)),
        compiler_params=pltpu.CompilerParams(
            dimension_semantics=("parallel",),        # shards blocks across TCs
            vmem_limit_bytes=48 * 1024 * 1024),
    )(x_packed, params["dw_bd"], params["db_p"], params["wg_bd"],
      params["bg_p"], params["w2_bd"], params["b2_p"], params["w3_bd"],
      params["b3_p"])

    # unpack: (block i, packed row p, lane 8j+b) -> graph i*tile_g + 4p + j.
    out = out.reshape(padded_graphs, NUM_BITS)
    return out[:num_graphs]


def init_params(key):
    ks = jax.random.split(key, 12)
    d, b = EMB_DIM, NUM_BITS
    u = lambda k, shape, fan: jax.random.uniform(
        k, shape, jnp.float32, -1.0 / math.sqrt(fan), 1.0 / math.sqrt(fan))

    def bd4(w):                       # (a, c) -> (4a, 4c) block-diagonal
        return jnp.kron(jnp.eye(PACK, dtype=w.dtype), w)

    def lane4(v):                     # (1, c) -> (1, 4c): 4 packed copies
        return jnp.tile(v, (1, PACK))

    # BitwiseEmbedding (num_bits embeddings of shape (2, D)) folded with the
    # encoder Linear:  h = gelu(bits @ (diff @ W1) + (base @ W1 + b1))  (exact)
    emb_w = jax.random.normal(ks[0], (b, 2, d), jnp.float32)
    emb_base = jnp.sum(emb_w[:, 0, :], axis=0, keepdims=True)      # (1, D)
    emb_diff = emb_w[:, 1, :] - emb_w[:, 0, :]                     # (b, D)
    w1_t = u(ks[1], (d, d), d)
    b1 = u(ks[2], (1, d), d)
    dw = jnp.dot(emb_diff, w1_t)                                   # (b, D)
    db = jnp.dot(emb_base, w1_t) + b1                              # (1, D)

    # GRUCell(D, D): per-gate (in, out) weights, gate order (r, z, n).
    w_ih = u(ks[3], (d, 3 * d), d)
    w_hh = u(ks[4], (d, 3 * d), d)
    b_ih = u(ks[5], (1, 3 * d), d)
    b_hh = u(ks[6], (1, 3 * d), d)

    # Merged + 4-lane-packed gate weight: (128, 768), 128-lane column groups
    # [r_x | z_x | n_x | r_h | z_h | n_h]; each group is block-diagonal
    # (4 copies of the 32x32 gate matrix) so gate slices are vreg-aligned.
    wg = jnp.concatenate(
        [bd4(w_ih[:, 0:d]), bd4(w_ih[:, d:2 * d]), bd4(w_ih[:, 2 * d:3 * d]),
         bd4(w_hh[:, 0:d]), bd4(w_hh[:, d:2 * d]), bd4(w_hh[:, 2 * d:3 * d])],
        axis=1)
    # Folded gate bias, added once per level to g = x2 @ wg:
    # r/z take (b_i + b_h) on the x columns; n keeps b_in on x columns and
    # b_hn on the h columns (it sits inside the r-gate product).
    bg = jnp.concatenate(
        [lane4(b_ih[:, 0:d] + b_hh[:, 0:d]),
         lane4(b_ih[:, d:2 * d] + b_hh[:, d:2 * d]),
         lane4(b_ih[:, 2 * d:3 * d]),
         jnp.zeros((1, 2 * PACK * d), jnp.float32),
         lane4(b_hh[:, 2 * d:3 * d])], axis=1)                    # (1, 768)

    # decoder Linear(D, D) and Linear(D, num_bits)
    w2_t = u(ks[7], (d, d), d)
    b2 = u(ks[8], (1, d), d)
    w3_t = u(ks[9], (d, b), d)
    b3 = u(ks[10], (1, b), d)

    return {
        # bf16 MXU operands (f32 accumulation via preferred_element_type).
        "dw_bd": bd4(dw).astype(jnp.bfloat16),       # (32, 128)
        "db_p": lane4(db),                           # (1, 128) f32
        "wg_bd": wg.astype(jnp.bfloat16),            # (128, 768)
        "bg_p": bg,                                  # (1, 768) f32
        "w2_bd": bd4(w2_t).astype(jnp.bfloat16),     # (128, 128)
        "b2_p": lane4(b2),                           # (1, 128) f32
        "w3_bd": bd4(w3_t).astype(jnp.bfloat16),     # (128, 32)
        "b3_p": lane4(b3),                           # (1, 32) f32
    }


if __name__ == "__main__":
    key = jax.random.PRNGKey(0)
    k_param, k_x = jax.random.split(key)

    num_graphs, per_group = 4, 8
    n_elems = num_graphs * per_group

    # x: (N, num_bits) bits in {0, 1}; batch: sorted group index per element.
    x_bits = jax.random.bernoulli(k_x, 0.5, (n_elems, NUM_BITS)).astype(jnp.int32)
    batch = jnp.repeat(jnp.arange(num_graphs, dtype=jnp.int32), per_group)

    params = init_params(k_param)

    out = lcm_forward(x_bits, batch, params, num_graphs, per_group)
    out = jax.block_until_ready(out)

    assert out.shape == (num_graphs, NUM_BITS), out.shape
    assert bool(jnp.all(jnp.isfinite(out)))
    print("KERNEL_OK")
</pallas_src>

<mosaic_0001>
module attributes {stable_mosaic.version = 11 : i64} {
  func.func @_fused_lcm_kernel(%arg0: i32, %arg1: memref<1x8x32xi32, #tpu.memory_space<vmem>>, %arg2: memref<32x128xbf16, #tpu.memory_space<vmem>>, %arg3: memref<1x128xf32, #tpu.memory_space<vmem>>, %arg4: memref<128x768xbf16, #tpu.memory_space<vmem>>, %arg5: memref<1x768xf32, #tpu.memory_space<vmem>>, %arg6: memref<128x128xbf16, #tpu.memory_space<vmem>>, %arg7: memref<1x128xf32, #tpu.memory_space<vmem>>, %arg8: memref<128x32xbf16, #tpu.memory_space<vmem>>, %arg9: memref<1x32xf32, #tpu.memory_space<vmem>>, %arg10: memref<1x1x32xf32, #tpu.memory_space<vmem>>) attributes {dimension_semantics = [#tpu.dimension_semantics<parallel>], iteration_bounds = array<i64: 1>, scalar_prefetch = 0 : i64, scratch_operands = 0 : i64, tpu.core_type = #tpu.core_type<tc>, window_params = [{transform_indices = @transform_0, window_bounds = array<i64: 1, 8, 32>}, {pipeline_mode = #tpu.pipeline_mode<synchronous>, transform_indices = @transform_1, window_bounds = array<i64: 32, 128>}, {pipeline_mode = #tpu.pipeline_mode<synchronous>, transform_indices = @transform_2, window_bounds = array<i64: 1, 128>}, {pipeline_mode = #tpu.pipeline_mode<synchronous>, transform_indices = @transform_3, window_bounds = array<i64: 128, 768>}, {pipeline_mode = #tpu.pipeline_mode<synchronous>, transform_indices = @transform_4, window_bounds = array<i64: 1, 768>}, {pipeline_mode = #tpu.pipeline_mode<synchronous>, transform_indices = @transform_5, window_bounds = array<i64: 128, 128>}, {pipeline_mode = #tpu.pipeline_mode<synchronous>, transform_indices = @transform_6, window_bounds = array<i64: 1, 128>}, {pipeline_mode = #tpu.pipeline_mode<synchronous>, transform_indices = @transform_7, window_bounds = array<i64: 128, 32>}, {pipeline_mode = #tpu.pipeline_mode<synchronous>, transform_indices = @transform_8, window_bounds = array<i64: 1, 32>}, {transform_indices = @transform_9, window_bounds = array<i64: 1, 1, 32>}]} {
    %c0 = arith.constant 0 : index
    %c0_0 = arith.constant 0 : index
    %c0_1 = arith.constant 0 : index
    %0 = vector.load %arg1[%c0, %c0_0, %c0_1] : memref<1x8x32xi32, #tpu.memory_space<vmem>>, vector<1x8x32xi32>
    %1 = vector.shape_cast %0 : vector<1x8x32xi32> to vector<8x32xi32>
    %2 = arith.sitofp %1 : vector<8x32xi32> to vector<8x32xf32>
    %3 = arith.truncf %2 : vector<8x32xf32> to vector<8x32xbf16>
    %c0_2 = arith.constant 0 : index
    %c0_3 = arith.constant 0 : index
    %4 = vector.load %arg2[%c0_2, %c0_3] : memref<32x128xbf16, #tpu.memory_space<vmem>>, vector<32x128xbf16>
    %cst = arith.constant dense<0.000000e+00> : vector<8x128xf32>
    %5 = tpu.matmul %3, %4, %cst {dimension_numbers = #tpu.dot_dimension_numbers<[1], [0], [0], [1], [0, 0, 1, 1], [], []>} : vector<8x32xbf16>, vector<32x128xbf16>, vector<8x128xf32> -> vector<8x128xf32>
    %c0_4 = arith.constant 0 : index
    %c0_5 = arith.constant 0 : index
    %6 = vector.load %arg3[%c0_4, %c0_5] : memref<1x128xf32, #tpu.memory_space<vmem>>, vector<1x128xf32>
    %7 = vector.broadcast %6 : vector<1x128xf32> to vector<8x128xf32>
    %8 = arith.addf %5, %7 : vector<8x128xf32>
    %cst_6 = arith.constant 0.707106769 : f32
    %9 = vector.broadcast %cst_6 : f32 to vector<8x128xf32>
    %10 = arith.mulf %8, %9 : vector<8x128xf32>
    %11 = math.absf %10 : vector<8x128xf32>
    %cst_7 = arith.constant 0.327591091 : f32
    %12 = vector.broadcast %cst_7 : f32 to vector<8x128xf32>
    %13 = arith.mulf %12, %11 : vector<8x128xf32>
    %cst_8 = arith.constant 1.000000e+00 : f32
    %14 = vector.broadcast %cst_8 : f32 to vector<8x128xf32>
    %15 = arith.addf %14, %13 : vector<8x128xf32>
    %cst_9 = arith.constant 1.000000e+00 : f32
    %16 = vector.broadcast %cst_9 : f32 to vector<8x128xf32>
    %17 = arith.divf %16, %15 : vector<8x128xf32>
    %cst_10 = arith.constant 1.06140542 : f32
    %18 = vector.broadcast %cst_10 : f32 to vector<8x128xf32>
    %19 = arith.mulf %18, %17 : vector<8x128xf32>
    %cst_11 = arith.constant 1.45315206 : f32
    %20 = vector.broadcast %cst_11 : f32 to vector<8x128xf32>
    %21 = arith.subf %19, %20 : vector<8x128xf32>
    %22 = arith.mulf %21, %17 : vector<8x128xf32>
    %cst_12 = arith.constant 1.42141378 : f32
    %23 = vector.broadcast %cst_12 : f32 to vector<8x128xf32>
    %24 = arith.addf %22, %23 : vector<8x128xf32>
    %25 = arith.mulf %24, %17 : vector<8x128xf32>
    %cst_13 = arith.constant 0.284496725 : f32
    %26 = vector.broadcast %cst_13 : f32 to vector<8x128xf32>
    %27 = arith.subf %25, %26 : vector<8x128xf32>
    %28 = arith.mulf %27, %17 : vector<8x128xf32>
    %cst_14 = arith.constant 0.254829586 : f32
    %29 = vector.broadcast %cst_14 : f32 to vector<8x128xf32>
    %30 = arith.addf %28, %29 : vector<8x128xf32>
    %31 = arith.mulf %30, %17 : vector<8x128xf32>
    %cst_15 = arith.constant 0.000000e+00 : f32
    %32 = vector.broadcast %cst_15 : f32 to vector<8x128xf32>
    %33 = arith.subf %32, %11 : vector<8x128xf32>
    %34 = arith.mulf %33, %11 : vector<8x128xf32>
    %35 = math.exp %34 : vector<8x128xf32>
    %36 = arith.mulf %31, %35 : vector<8x128xf32>
    %cst_16 = arith.constant 1.000000e+00 : f32
    %37 = vector.broadcast %cst_16 : f32 to vector<8x128xf32>
    %38 = arith.subf %37, %36 : vector<8x128xf32>
    %cst_17 = arith.constant 0.000000e+00 : f32
    %39 = vector.broadcast %cst_17 : f32 to vector<8x128xf32>
    %40 = arith.cmpf olt, %10, %39 : vector<8x128xf32>
    %cst_18 = arith.constant 0.000000e+00 : f32
    %41 = vector.broadcast %cst_18 : f32 to vector<8x128xf32>
    %42 = arith.subf %41, %38 : vector<8x128xf32>
    %43 = arith.select %40, %42, %38 : vector<8x128xi1>, vector<8x128xf32>
    %cst_19 = arith.constant 5.000000e-01 : f32
    %44 = vector.broadcast %cst_19 : f32 to vector<8x128xf32>
    %45 = arith.mulf %44, %8 : vector<8x128xf32>
    %cst_20 = arith.constant 1.000000e+00 : f32
    %46 = vector.broadcast %cst_20 : f32 to vector<8x128xf32>
    %47 = arith.addf %46, %43 : vector<8x128xf32>
    %48 = arith.mulf %45, %47 : vector<8x128xf32>
    %c0_21 = arith.constant 0 : index
    %c0_22 = arith.constant 0 : index
    %49 = vector.load %arg4[%c0_21, %c0_22] : memref<128x768xbf16, #tpu.memory_space<vmem>>, vector<128x768xbf16>
    %c0_23 = arith.constant 0 : index
    %c0_24 = arith.constant 0 : index
    %50 = vector.load %arg5[%c0_23, %c0_24] : memref<1x768xf32, #tpu.memory_space<vmem>>, vector<1x768xf32>
    %51 = vector.extract_strided_slice %48 {offsets = [0, 0], sizes = [4, 128], strides = [1, 1]} : vector<8x128xf32> to vector<4x128xf32>
    %52 = vector.extract_strided_slice %48 {offsets = [4, 0], sizes = [4, 128], strides = [1, 1]} : vector<8x128xf32> to vector<4x128xf32>
    %53 = arith.truncf %48 : vector<8x128xf32> to vector<8x128xbf16>
    %cst_25 = arith.constant dense<0.000000e+00> : vector<8x768xf32>
    %54 = tpu.matmul %53, %49, %cst_25 {dimension_numbers = #tpu.dot_dimension_numbers<[1], [0], [0], [1], [0, 0, 1, 1], [], []>} : vector<8x128xbf16>, vector<128x768xbf16>, vector<8x768xf32> -> vector<8x768xf32>
    %55 = vector.broadcast %50 : vector<1x768xf32> to vector<8x768xf32>
    %56 = arith.addf %54, %55 : vector<8x768xf32>
    %57 = vector.extract_strided_slice %56 {offsets = [0, 0], sizes = [4, 768], strides = [1, 1]} : vector<8x768xf32> to vector<4x768xf32>
    %58 = vector.extract_strided_slice %56 {offsets = [4, 0], sizes = [4, 768], strides = [1, 1]} : vector<8x768xf32> to vector<4x768xf32>
    %59 = vector.extract_strided_slice %57 {offsets = [0, 0], sizes = [4, 128], strides = [1, 1]} : vector<4x768xf32> to vector<4x128xf32>
    %60 = vector.extract_strided_slice %58 {offsets = [0, 384], sizes = [4, 128], strides = [1, 1]} : vector<4x768xf32> to vector<4x128xf32>
    %61 = arith.addf %59, %60 : vector<4x128xf32>
    %62 = arith.negf %61 : vector<4x128xf32>
    %63 = math.exp %62 : vector<4x128xf32>
    %cst_26 = arith.constant 1.000000e+00 : f32
    %64 = vector.broadcast %cst_26 : f32 to vector<4x128xf32>
    %65 = arith.addf %64, %63 : vector<4x128xf32>
    %66 = arith.divf %64, %65 : vector<4x128xf32>
    %67 = vector.extract_strided_slice %57 {offsets = [0, 128], sizes = [4, 128], strides = [1, 1]} : vector<4x768xf32> to vector<4x128xf32>
    %68 = vector.extract_strided_slice %58 {offsets = [0, 512], sizes = [4, 128], strides = [1, 1]} : vector<4x768xf32> to vector<4x128xf32>
    %69 = arith.addf %67, %68 : vector<4x128xf32>
    %70 = arith.negf %69 : vector<4x128xf32>
    %71 = math.exp %70 : vector<4x128xf32>
    %cst_27 = arith.constant 1.000000e+00 : f32
    %72 = vector.broadcast %cst_27 : f32 to vector<4x128xf32>
    %73 = arith.addf %72, %71 : vector<4x128xf32>
    %74 = arith.divf %72, %73 : vector<4x128xf32>
    %75 = vector.extract_strided_slice %57 {offsets = [0, 256], sizes = [4, 128], strides = [1, 1]} : vector<4x768xf32> to vector<4x128xf32>
    %76 = vector.extract_strided_slice %58 {offsets = [0, 640], sizes = [4, 128], strides = [1, 1]} : vector<4x768xf32> to vector<4x128xf32>
    %77 = arith.mulf %66, %76 : vector<4x128xf32>
    %78 = arith.addf %75, %77 : vector<4x128xf32>
    %79 = math.tanh %78 : vector<4x128xf32>
    %80 = arith.subf %52, %79 : vector<4x128xf32>
    %81 = arith.mulf %74, %80 : vector<4x128xf32>
    %82 = arith.addf %79, %81 : vector<4x128xf32>
    %83 = vector.extract_strided_slice %58 {offsets = [0, 0], sizes = [4, 128], strides = [1, 1]} : vector<4x768xf32> to vector<4x128xf32>
    %84 = vector.extract_strided_slice %57 {offsets = [0, 384], sizes = [4, 128], strides = [1, 1]} : vector<4x768xf32> to vector<4x128xf32>
    %85 = arith.addf %83, %84 : vector<4x128xf32>
    %86 = arith.negf %85 : vector<4x128xf32>
    %87 = math.exp %86 : vector<4x128xf32>
    %cst_28 = arith.constant 1.000000e+00 : f32
    %88 = vector.broadcast %cst_28 : f32 to vector<4x128xf32>
    %89 = arith.addf %88, %87 : vector<4x128xf32>
    %90 = arith.divf %88, %89 : vector<4x128xf32>
    %91 = vector.extract_strided_slice %58 {offsets = [0, 128], sizes = [4, 128], strides = [1, 1]} : vector<4x768xf32> to vector<4x128xf32>
    %92 = vector.extract_strided_slice %57 {offsets = [0, 512], sizes = [4, 128], strides = [1, 1]} : vector<4x768xf32> to vector<4x128xf32>
    %93 = arith.addf %91, %92 : vector<4x128xf32>
    %94 = arith.negf %93 : vector<4x128xf32>
    %95 = math.exp %94 : vector<4x128xf32>
    %cst_29 = arith.constant 1.000000e+00 : f32
    %96 = vector.broadcast %cst_29 : f32 to vector<4x128xf32>
    %97 = arith.addf %96, %95 : vector<4x128xf32>
    %98 = arith.divf %96, %97 : vector<4x128xf32>
    %99 = vector.extract_strided_slice %58 {offsets = [0, 256], sizes = [4, 128], strides = [1, 1]} : vector<4x768xf32> to vector<4x128xf32>
    %100 = vector.extract_strided_slice %57 {offsets = [0, 640], sizes = [4, 128], strides = [1, 1]} : vector<4x768xf32> to vector<4x128xf32>
    %101 = arith.mulf %90, %100 : vector<4x128xf32>
    %102 = arith.addf %99, %101 : vector<4x128xf32>
    %103 = math.tanh %102 : vector<4x128xf32>
    %104 = arith.subf %51, %103 : vector<4x128xf32>
    %105 = arith.mulf %98, %104 : vector<4x128xf32>
    %106 = arith.addf %103, %105 : vector<4x128xf32>
    %107 = arith.addf %82, %106 : vector<4x128xf32>
    %cst_30 = arith.constant 5.000000e-01 : f32
    %108 = vector.broadcast %cst_30 : f32 to vector<4x128xf32>
    %109 = arith.mulf %108, %107 : vector<4x128xf32>
    %110 = vector.extract_strided_slice %109 {offsets = [0, 0], sizes = [2, 128], strides = [1, 1]} : vector<4x128xf32> to vector<2x128xf32>
    %111 = vector.extract_strided_slice %109 {offsets = [2, 0], sizes = [2, 128], strides = [1, 1]} : vector<4x128xf32> to vector<2x128xf32>
    %112 = arith.truncf %109 : vector<4x128xf32> to vector<4x128xbf16>
    %cst_31 = arith.constant dense<0.000000e+00> : vector<4x768xf32>
    %113 = tpu.matmul %112, %49, %cst_31 {dimension_numbers = #tpu.dot_dimension_numbers<[1], [0], [0], [1], [0, 0, 1, 1], [], []>} : vector<4x128xbf16>, vector<128x768xbf16>, vector<4x768xf32> -> vector<4x768xf32>
    %114 = vector.broadcast %50 : vector<1x768xf32> to vector<4x768xf32>
    %115 = arith.addf %113, %114 : vector<4x768xf32>
    %116 = vector.extract_strided_slice %115 {offsets = [0, 0], sizes = [2, 768], strides = [1, 1]} : vector<4x768xf32> to vector<2x768xf32>
    %117 = vector.extract_strided_slice %115 {offsets = [2, 0], sizes = [2, 768], strides = [1, 1]} : vector<4x768xf32> to vector<2x768xf32>
    %118 = vector.extract_strided_slice %116 {offsets = [0, 0], sizes = [2, 128], strides = [1, 1]} : vector<2x768xf32> to vector<2x128xf32>
    %119 = vector.extract_strided_slice %117 {offsets = [0, 384], sizes = [2, 128], strides = [1, 1]} : vector<2x768xf32> to vector<2x128xf32>
    %120 = arith.addf %118, %119 : vector<2x128xf32>
    %121 = arith.negf %120 : vector<2x128xf32>
    %122 = math.exp %121 : vector<2x128xf32>
    %cst_32 = arith.constant 1.000000e+00 : f32
    %123 = vector.broadcast %cst_32 : f32 to vector<2x128xf32>
    %124 = arith.addf %123, %122 : vector<2x128xf32>
    %125 = arith.divf %123, %124 : vector<2x128xf32>
    %126 = vector.extract_strided_slice %116 {offsets = [0, 128], sizes = [2, 128], strides = [1, 1]} : vector<2x768xf32> to vector<2x128xf32>
    %127 = vector.extract_strided_slice %117 {offsets = [0, 512], sizes = [2, 128], strides = [1, 1]} : vector<2x768xf32> to vector<2x128xf32>
    %128 = arith.addf %126, %127 : vector<2x128xf32>
    %129 = arith.negf %128 : vector<2x128xf32>
    %130 = math.exp %129 : vector<2x128xf32>
    %cst_33 = arith.constant 1.000000e+00 : f32
    %131 = vector.broadcast %cst_33 : f32 to vector<2x128xf32>
    %132 = arith.addf %131, %130 : vector<2x128xf32>
    %133 = arith.divf %131, %132 : vector<2x128xf32>
    %134 = vector.extract_strided_slice %116 {offsets = [0, 256], sizes = [2, 128], strides = [1, 1]} : vector<2x768xf32> to vector<2x128xf32>
    %135 = vector.extract_strided_slice %117 {offsets = [0, 640], sizes = [2, 128], strides = [1, 1]} : vector<2x768xf32> to vector<2x128xf32>
    %136 = arith.mulf %125, %135 : vector<2x128xf32>
    %137 = arith.addf %134, %136 : vector<2x128xf32>
    %138 = math.tanh %137 : vector<2x128xf32>
    %139 = arith.subf %111, %138 : vector<2x128xf32>
    %140 = arith.mulf %133, %139 : vector<2x128xf32>
    %141 = arith.addf %138, %140 : vector<2x128xf32>
    %142 = vector.extract_strided_slice %117 {offsets = [0, 0], sizes = [2, 128], strides = [1, 1]} : vector<2x768xf32> to vector<2x128xf32>
    %143 = vector.extract_strided_slice %116 {offsets = [0, 384], sizes = [2, 128], strides = [1, 1]} : vector<2x768xf32> to vector<2x128xf32>
    %144 = arith.addf %142, %143 : vector<2x128xf32>
    %145 = arith.negf %144 : vector<2x128xf32>
    %146 = math.exp %145 : vector<2x128xf32>
    %cst_34 = arith.constant 1.000000e+00 : f32
    %147 = vector.broadcast %cst_34 : f32 to vector<2x128xf32>
    %148 = arith.addf %147, %146 : vector<2x128xf32>
    %149 = arith.divf %147, %148 : vector<2x128xf32>
    %150 = vector.extract_strided_slice %117 {offsets = [0, 128], sizes = [2, 128], strides = [1, 1]} : vector<2x768xf32> to vector<2x128xf32>
    %151 = vector.extract_strided_slice %116 {offsets = [0, 512], sizes = [2, 128], strides = [1, 1]} : vector<2x768xf32> to vector<2x128xf32>
    %152 = arith.addf %150, %151 : vector<2x128xf32>
    %153 = arith.negf %152 : vector<2x128xf32>
    %154 = math.exp %153 : vector<2x128xf32>
    %cst_35 = arith.constant 1.000000e+00 : f32
    %155 = vector.broadcast %cst_35 : f32 to vector<2x128xf32>
    %156 = arith.addf %155, %154 : vector<2x128xf32>
    %157 = arith.divf %155, %156 : vector<2x128xf32>
    %158 = vector.extract_strided_slice %117 {offsets = [0, 256], sizes = [2, 128], strides = [1, 1]} : vector<2x768xf32> to vector<2x128xf32>
    %159 = vector.extract_strided_slice %116 {offsets = [0, 640], sizes = [2, 128], strides = [1, 1]} : vector<2x768xf32> to vector<2x128xf32>
    %160 = arith.mulf %149, %159 : vector<2x128xf32>
    %161 = arith.addf %158, %160 : vector<2x128xf32>
    %162 = math.tanh %161 : vector<2x128xf32>
    %163 = arith.subf %110, %162 : vector<2x128xf32>
    %164 = arith.mulf %157, %163 : vector<2x128xf32>
    %165 = arith.addf %162, %164 : vector<2x128xf32>
    %166 = arith.addf %141, %165 : vector<2x128xf32>
    %cst_36 = arith.constant 5.000000e-01 : f32
    %167 = vector.broadcast %cst_36 : f32 to vector<2x128xf32>
    %168 = arith.mulf %167, %166 : vector<2x128xf32>
    %169 = vector.extract_strided_slice %168 {offsets = [0, 0], sizes = [1, 128], strides = [1, 1]} : vector<2x128xf32> to vector<1x128xf32>
    %170 = vector.extract_strided_slice %168 {offsets = [1, 0], sizes = [1, 128], strides = [1, 1]} : vector<2x128xf32> to vector<1x128xf32>
    %171 = arith.truncf %168 : vector<2x128xf32> to vector<2x128xbf16>
    %cst_37 = arith.constant dense<0.000000e+00> : vector<2x768xf32>
    %172 = tpu.matmul %171, %49, %cst_37 {dimension_numbers = #tpu.dot_dimension_numbers<[1], [0], [0], [1], [0, 0, 1, 1], [], []>} : vector<2x128xbf16>, vector<128x768xbf16>, vector<2x768xf32> -> vector<2x768xf32>
    %173 = vector.broadcast %50 : vector<1x768xf32> to vector<2x768xf32>
    %174 = arith.addf %172, %173 : vector<2x768xf32>
    %175 = vector.extract_strided_slice %174 {offsets = [0, 0], sizes = [1, 768], strides = [1, 1]} : vector<2x768xf32> to vector<1x768xf32>
    %176 = vector.extract_strided_slice %174 {offsets = [1, 0], sizes = [1, 768], strides = [1, 1]} : vector<2x768xf32> to vector<1x768xf32>
    %177 = vector.extract_strided_slice %175 {offsets = [0, 0], sizes = [1, 128], strides = [1, 1]} : vector<1x768xf32> to vector<1x128xf32>
    %178 = vector.extract_strided_slice %176 {offsets = [0, 384], sizes = [1, 128], strides = [1, 1]} : vector<1x768xf32> to vector<1x128xf32>
    %179 = arith.addf %177, %178 : vector<1x128xf32>
    %180 = arith.negf %179 : vector<1x128xf32>
    %181 = math.exp %180 : vector<1x128xf32>
    %cst_38 = arith.constant 1.000000e+00 : f32
    %182 = vector.broadcast %cst_38 : f32 to vector<1x128xf32>
    %183 = arith.addf %182, %181 : vector<1x128xf32>
    %184 = arith.divf %182, %183 : vector<1x128xf32>
    %185 = vector.extract_strided_slice %175 {offsets = [0, 128], sizes = [1, 128], strides = [1, 1]} : vector<1x768xf32> to vector<1x128xf32>
    %186 = vector.extract_strided_slice %176 {offsets = [0, 512], sizes = [1, 128], strides = [1, 1]} : vector<1x768xf32> to vector<1x128xf32>
    %187 = arith.addf %185, %186 : vector<1x128xf32>
    %188 = arith.negf %187 : vector<1x128xf32>
    %189 = math.exp %188 : vector<1x128xf32>
    %cst_39 = arith.constant 1.000000e+00 : f32
    %190 = vector.broadcast %cst_39 : f32 to vector<1x128xf32>
    %191 = arith.addf %190, %189 : vector<1x128xf32>
    %192 = arith.divf %190, %191 : vector<1x128xf32>
    %193 = vector.extract_strided_slice %175 {offsets = [0, 256], sizes = [1, 128], strides = [1, 1]} : vector<1x768xf32> to vector<1x128xf32>
    %194 = vector.extract_strided_slice %176 {offsets = [0, 640], sizes = [1, 128], strides = [1, 1]} : vector<1x768xf32> to vector<1x128xf32>
    %195 = arith.mulf %184, %194 : vector<1x128xf32>
    %196 = arith.addf %193, %195 : vector<1x128xf32>
    %197 = math.tanh %196 : vector<1x128xf32>
    %198 = arith.subf %170, %197 : vector<1x128xf32>
    %199 = arith.mulf %192, %198 : vector<1x128xf32>
    %200 = arith.addf %197, %199 : vector<1x128xf32>
    %201 = vector.extract_strided_slice %176 {offsets = [0, 0], sizes = [1, 128], strides = [1, 1]} : vector<1x768xf32> to vector<1x128xf32>
    %202 = vector.extract_strided_slice %175 {offsets = [0, 384], sizes = [1, 128], strides = [1, 1]} : vector<1x768xf32> to vector<1x128xf32>
    %203 = arith.addf %201, %202 : vector<1x128xf32>
    %204 = arith.negf %203 : vector<1x128xf32>
    %205 = math.exp %204 : vector<1x128xf32>
    %cst_40 = arith.constant 1.000000e+00 : f32
    %206 = vector.broadcast %cst_40 : f32 to vector<1x128xf32>
    %207 = arith.addf %206, %205 : vector<1x128xf32>
    %208 = arith.divf %206, %207 : vector<1x128xf32>
    %209 = vector.extract_strided_slice %176 {offsets = [0, 128], sizes = [1, 128], strides = [1, 1]} : vector<1x768xf32> to vector<1x128xf32>
    %210 = vector.extract_strided_slice %175 {offsets = [0, 512], sizes = [1, 128], strides = [1, 1]} : vector<1x768xf32> to vector<1x128xf32>
    %211 = arith.addf %209, %210 : vector<1x128xf32>
    %212 = arith.negf %211 : vector<1x128xf32>
    %213 = math.exp %212 : vector<1x128xf32>
    %cst_41 = arith.constant 1.000000e+00 : f32
    %214 = vector.broadcast %cst_41 : f32 to vector<1x128xf32>
    %215 = arith.addf %214, %213 : vector<1x128xf32>
    %216 = arith.divf %214, %215 : vector<1x128xf32>
    %217 = vector.extract_strided_slice %176 {offsets = [0, 256], sizes = [1, 128], strides = [1, 1]} : vector<1x768xf32> to vector<1x128xf32>
    %218 = vector.extract_strided_slice %175 {offsets = [0, 640], sizes = [1, 128], strides = [1, 1]} : vector<1x768xf32> to vector<1x128xf32>
    %219 = arith.mulf %208, %218 : vector<1x128xf32>
    %220 = arith.addf %217, %219 : vector<1x128xf32>
    %221 = math.tanh %220 : vector<1x128xf32>
    %222 = arith.subf %169, %221 : vector<1x128xf32>
    %223 = arith.mulf %216, %222 : vector<1x128xf32>
    %224 = arith.addf %221, %223 : vector<1x128xf32>
    %225 = arith.addf %200, %224 : vector<1x128xf32>
    %cst_42 = arith.constant 5.000000e-01 : f32
    %226 = vector.broadcast %cst_42 : f32 to vector<1x128xf32>
    %227 = arith.mulf %226, %225 : vector<1x128xf32>
    %228 = arith.truncf %227 : vector<1x128xf32> to vector<1x128xbf16>
    %c0_43 = arith.constant 0 : index
    %c0_44 = arith.constant 0 : index
    %229 = vector.load %arg6[%c0_43, %c0_44] : memref<128x128xbf16, #tpu.memory_space<vmem>>, vector<128x128xbf16>
    %cst_45 = arith.constant dense<0.000000e+00> : vector<1x128xf32>
    %230 = tpu.matmul %228, %229, %cst_45 {dimension_numbers = #tpu.dot_dimension_numbers<[1], [0], [0], [1], [0, 0, 1, 1], [], []>} : vector<1x128xbf16>, vector<128x128xbf16>, vector<1x128xf32> -> vector<1x128xf32>
    %c0_46 = arith.constant 0 : index
    %c0_47 = arith.constant 0 : index
    %231 = vector.load %arg7[%c0_46, %c0_47] : memref<1x128xf32, #tpu.memory_space<vmem>>, vector<1x128xf32>
    %232 = arith.addf %230, %231 : vector<1x128xf32>
    %cst_48 = arith.constant 0.707106769 : f32
    %233 = vector.broadcast %cst_48 : f32 to vector<1x128xf32>
    %234 = arith.mulf %232, %233 : vector<1x128xf32>
    %235 = math.absf %234 : vector<1x128xf32>
    %cst_49 = arith.constant 0.327591091 : f32
    %236 = vector.broadcast %cst_49 : f32 to vector<1x128xf32>
    %237 = arith.mulf %236, %235 : vector<1x128xf32>
    %cst_50 = arith.constant 1.000000e+00 : f32
    %238 = vector.broadcast %cst_50 : f32 to vector<1x128xf32>
    %239 = arith.addf %238, %237 : vector<1x128xf32>
    %cst_51 = arith.constant 1.000000e+00 : f32
    %240 = vector.broadcast %cst_51 : f32 to vector<1x128xf32>
    %241 = arith.divf %240, %239 : vector<1x128xf32>
    %cst_52 = arith.constant 1.06140542 : f32
    %242 = vector.broadcast %cst_52 : f32 to vector<1x128xf32>
    %243 = arith.mulf %242, %241 : vector<1x128xf32>
    %cst_53 = arith.constant 1.45315206 : f32
    %244 = vector.broadcast %cst_53 : f32 to vector<1x128xf32>
    %245 = arith.subf %243, %244 : vector<1x128xf32>
    %246 = arith.mulf %245, %241 : vector<1x128xf32>
    %cst_54 = arith.constant 1.42141378 : f32
    %247 = vector.broadcast %cst_54 : f32 to vector<1x128xf32>
    %248 = arith.addf %246, %247 : vector<1x128xf32>
    %249 = arith.mulf %248, %241 : vector<1x128xf32>
    %cst_55 = arith.constant 0.284496725 : f32
    %250 = vector.broadcast %cst_55 : f32 to vector<1x128xf32>
    %251 = arith.subf %249, %250 : vector<1x128xf32>
    %252 = arith.mulf %251, %241 : vector<1x128xf32>
    %cst_56 = arith.constant 0.254829586 : f32
    %253 = vector.broadcast %cst_56 : f32 to vector<1x128xf32>
    %254 = arith.addf %252, %253 : vector<1x128xf32>
    %255 = arith.mulf %254, %241 : vector<1x128xf32>
    %cst_57 = arith.constant 0.000000e+00 : f32
    %256 = vector.broadcast %cst_57 : f32 to vector<1x128xf32>
    %257 = arith.subf %256, %235 : vector<1x128xf32>
    %258 = arith.mulf %257, %235 : vector<1x128xf32>
    %259 = math.exp %258 : vector<1x128xf32>
    %260 = arith.mulf %255, %259 : vector<1x128xf32>
    %cst_58 = arith.constant 1.000000e+00 : f32
    %261 = vector.broadcast %cst_58 : f32 to vector<1x128xf32>
    %262 = arith.subf %261, %260 : vector<1x128xf32>
    %cst_59 = arith.constant 0.000000e+00 : f32
    %263 = vector.broadcast %cst_59 : f32 to vector<1x128xf32>
    %264 = arith.cmpf olt, %234, %263 : vector<1x128xf32>
    %cst_60 = arith.constant 0.000000e+00 : f32
    %265 = vector.broadcast %cst_60 : f32 to vector<1x128xf32>
    %266 = arith.subf %265, %262 : vector<1x128xf32>
    %267 = arith.select %264, %266, %262 : vector<1x128xi1>, vector<1x128xf32>
    %cst_61 = arith.constant 5.000000e-01 : f32
    %268 = vector.broadcast %cst_61 : f32 to vector<1x128xf32>
    %269 = arith.mulf %268, %232 : vector<1x128xf32>
    %cst_62 = arith.constant 1.000000e+00 : f32
    %270 = vector.broadcast %cst_62 : f32 to vector<1x128xf32>
    %271 = arith.addf %270, %267 : vector<1x128xf32>
    %272 = arith.mulf %269, %271 : vector<1x128xf32>
    %273 = arith.truncf %272 : vector<1x128xf32> to vector<1x128xbf16>
    %c0_63 = arith.constant 0 : index
    %c0_64 = arith.constant 0 : index
    %274 = vector.load %arg8[%c0_63, %c0_64] : memref<128x32xbf16, #tpu.memory_space<vmem>>, vector<128x32xbf16>
    %cst_65 = arith.constant dense<0.000000e+00> : vector<1x32xf32>
    %275 = tpu.matmul %273, %274, %cst_65 {dimension_numbers = #tpu.dot_dimension_numbers<[1], [0], [0], [1], [0, 0, 1, 1], [], []>} : vector<1x128xbf16>, vector<128x32xbf16>, vector<1x32xf32> -> vector<1x32xf32>
    %c0_66 = arith.constant 0 : index
    %c0_67 = arith.constant 0 : index
    %276 = vector.load %arg9[%c0_66, %c0_67] : memref<1x32xf32, #tpu.memory_space<vmem>>, vector<1x32xf32>
    %277 = arith.addf %275, %276 : vector<1x32xf32>
    %c0_68 = arith.constant 0 : index
    %c0_69 = arith.constant 0 : index
    %c0_70 = arith.constant 0 : index
    %278 = vector.load %arg10[%c0_68, %c0_69, %c0_70] : memref<1x1x32xf32, #tpu.memory_space<vmem>>, vector<1x1x32xf32>
    %279 = vector.shape_cast %278 : vector<1x1x32xf32> to vector<1x32xf32>
    %280 = vector.shape_cast %277 : vector<1x32xf32> to vector<1x1x32xf32>
    tpu.vector_store %arg10[%c0_68, %c0_69, %c0_70], %280 {strides = array<i32>} : memref<1x1x32xf32, #tpu.memory_space<vmem>>, vector<1x1x32xf32>,
    return
  }
  func.func @transform_0(%arg0: i32) -> (i32, i32, i32) {
    %c0_i32 = arith.constant 0 : i32
    %c0_i32_0 = arith.constant 0 : i32
    %c0_i32_1 = arith.constant 0 : i32
    return %arg0, %c0_i32, %c0_i32_0 : i32, i32, i32
  }
  func.func @transform_1(%arg0: i32) -> (i32, i32) {
    %c0_i32 = arith.constant 0 : i32
    %c0_i32_0 = arith.constant 0 : i32
    %c0_i32_1 = arith.constant 0 : i32
    return %c0_i32, %c0_i32_0 : i32, i32
  }
  func.func @transform_2(%arg0: i32) -> (i32, i32) {
    %c0_i32 = arith.constant 0 : i32
    %c0_i32_0 = arith.constant 0 : i32
    %c0_i32_1 = arith.constant 0 : i32
    return %c0_i32, %c0_i32_0 : i32, i32
  }
  func.func @transform_3(%arg0: i32) -> (i32, i32) {
    %c0_i32 = arith.constant 0 : i32
    %c0_i32_0 = arith.constant 0 : i32
    %c0_i32_1 = arith.constant 0 : i32
    return %c0_i32, %c0_i32_0 : i32, i32
  }
  func.func @transform_4(%arg0: i32) -> (i32, i32) {
    %c0_i32 = arith.constant 0 : i32
    %c0_i32_0 = arith.constant 0 : i32
    %c0_i32_1 = arith.constant 0 : i32
    return %c0_i32, %c0_i32_0 : i32, i32
  }
  func.func @transform_5(%arg0: i32) -> (i32, i32) {
    %c0_i32 = arith.constant 0 : i32
    %c0_i32_0 = arith.constant 0 : i32
    %c0_i32_1 = arith.constant 0 : i32
    return %c0_i32, %c0_i32_0 : i32, i32
  }
  func.func @transform_6(%arg0: i32) -> (i32, i32) {
    %c0_i32 = arith.constant 0 : i32
    %c0_i32_0 = arith.constant 0 : i32
    %c0_i32_1 = arith.constant 0 : i32
    return %c0_i32, %c0_i32_0 : i32, i32
  }
  func.func @transform_7(%arg0: i32) -> (i32, i32) {
    %c0_i32 = arith.constant 0 : i32
    %c0_i32_0 = arith.constant 0 : i32
    %c0_i32_1 = arith.constant 0 : i32
    return %c0_i32, %c0_i32_0 : i32, i32
  }
  func.func @transform_8(%arg0: i32) -> (i32, i32) {
    %c0_i32 = arith.constant 0 : i32
    %c0_i32_0 = arith.constant 0 : i32
    %c0_i32_1 = arith.constant 0 : i32
    return %c0_i32, %c0_i32_0 : i32, i32
  }
  func.func @transform_9(%arg0: i32) -> (i32, i32, i32) {
    %c0_i32 = arith.constant 0 : i32
    %c0_i32_0 = arith.constant 0 : i32
    %c0_i32_1 = arith.constant 0 : i32
    return %arg0, %c0_i32, %c0_i32_0 : i32, i32, i32
  }
}

</mosaic_0001>

<llo_original>
// kernel: tpu_custom_call.1
$region0: #{tpu_custom_call.1}
  #allocation0 [shape = 'u32[]', space=smem, size = 0x4, offset = 0x4, fixed_abs, tag = 'smem constant byte address 0x4 - core index']
  #allocation1 [shape = 'u32[144,128]{1,0:T(1,128)}', space=vmem, size = 0x12000, scoped, tag = 'internal scratch']
  %s0 = inlined_call_operand.vmem [shape: s32[1,8,32], index: 0, kind: input, shape index: {}]
  %s1 = inlined_call_operand.vmem [shape: bf16[32,128], index: 1, kind: input, shape index: {}]
  %s2 = inlined_call_operand.vmem [shape: f32[1,128], index: 2, kind: input, shape index: {}]
  %s3 = inlined_call_operand.hbm [shape: bf16[128,768], index: 3, kind: input, shape index: {}]
  %s4 = inlined_call_operand.hbm [shape: f32[1,768], index: 4, kind: input, shape index: {}]
  %s5 = inlined_call_operand.vmem [shape: bf16[128,128], index: 5, kind: input, shape index: {}]
  %s6 = inlined_call_operand.vmem [shape: f32[1,128], index: 6, kind: input, shape index: {}]
  %s7 = inlined_call_operand.vmem [shape: bf16[128,32], index: 7, kind: input, shape index: {}]
  %s8 = inlined_call_operand.vmem [shape: f32[1,32], index: 8, kind: input, shape index: {}]
  %s9 = inlined_call_operand.hbm [shape: f32[1,1,32], index: 9, kind: output, shape index: {}]
  %s10 = sld [smem:[#allocation0]]
  $region54: #{tpu_custom_call.1} parent=0
    _
  %s12 = ssub.s32 1, %s10
  %s13 = scalar_select 0, %s12, %s10
  $region1: #{tpu_custom_call.1} parent=0
    #allocation2 [shape = 'u8[196608]{0}', space=vmem, size = 0x30000, scoped, tag = 'input window, operand 3, single buffered']
    #allocation3 [shape = 's32[1]{0}', space=sflag, size = 0x4, scoped, tag = 'scoped memory for tpu_custom_call.1']
    #allocation4 [shape = 's32[1]{0}', space=sflag, size = 0x4, scoped, tag = 'scoped memory for tpu_custom_call.1']
    #allocation5 [shape = 'u8[3072]{0}', space=vmem, size = 0xc00, scoped, tag = 'input window, operand 4, single buffered']
    #allocation6 [shape = 's32[1]{0}', space=sflag, size = 0x4, scoped, tag = 'scoped memory for tpu_custom_call.1']
    #allocation7 [shape = 'u8[512]{0}', space=vmem, size = 0x400, scoped, tag = 'output window, operand 0, single buffered']
    %14 = vsyncpa [#allocation3], 0
    %15 = vsyncpa [#allocation6], 0
    %16 = vsyncpa [#allocation4], 0
    // Predicated region
    $region2: #{tpu_custom_call.1} parent=1 // pred_check
      _
    $region3: #{tpu_custom_call.1} parent=1 // pred_check_branch
      %18 = sbr.rel (0) target = $region5
    $region4: #{tpu_custom_call.1} parent=1 // pred_region
      _
    $region5: #{tpu_custom_call.1} parent=1 // pred_fallthru
      _
    // Predicated region
    $region6: #{tpu_custom_call.1} parent=1 // pred_check
      _
    $region7: #{tpu_custom_call.1} parent=1 // pred_check_branch
      %20 = sbr.rel (0) target = $region9
    $region8: #{tpu_custom_call.1} parent=1 // pred_region
      _
    $region9: #{tpu_custom_call.1} parent=1 // pred_fallthru
      _
    // Predicated region
    $region10: #{tpu_custom_call.1} parent=1 // pred_check
      _
    $region11: #{tpu_custom_call.1} parent=1 // pred_check_branch
      %22 = sbr.rel (0) target = $region13
    $region12: #{tpu_custom_call.1} parent=1 // pred_region
      _
    $region13: #{tpu_custom_call.1} parent=1 // pred_fallthru
      _
    // Predicated region
    $region14: #{tpu_custom_call.1} parent=1 // pred_check
      _
    $region15: #{tpu_custom_call.1} parent=1 // pred_check_branch
      %24 = sbr.rel (0) target = $region17
    $region16: #{tpu_custom_call.1} parent=1 // pred_region
      %s26 = ssub.s32 6144, 6144
      %27 = vsyncadd [#allocation3], %s26
      %s28 = sshll.u32 [#allocation2], 4
      %s29 = int_to_ptr.vmem [resolvable:$true] %s28
      %34 = dma.hbm_to_vmem [thread:$0]  %s3, 6144, %s29, [#allocation3], 384, 384, 24
    $region17: #{tpu_custom_call.1} parent=1 // pred_fallthru
      _
    // Predicated region
    $region18: #{tpu_custom_call.1} parent=1 // pred_check
      _
    $region19: #{tpu_custom_call.1} parent=1 // pred_check_branch
      %36 = sbr.rel (0) target = $region21
    $region20: #{tpu_custom_call.1} parent=1 // pred_region
      %s38 = ssub.s32 96, 96
      %39 = vsyncadd [#allocation6], %s38
      %s41 = sshll.u32 [#allocation5], 4
      %s42 = int_to_ptr.vmem [resolvable:$true] %s41
      %44 = dma.hbm_to_vmem [thread:$0]  %s4, 96, %s42, [#allocation6]
    $region21: #{tpu_custom_call.1} parent=1 // pred_fallthru
      _
    // Predicated region
    $region22: #{tpu_custom_call.1} parent=1 // pred_check
      _
    $region23: #{tpu_custom_call.1} parent=1 // pred_check_branch
      %46 = sbr.rel (0) target = $region25
    $region24: #{tpu_custom_call.1} parent=1 // pred_region
      _
    $region25: #{tpu_custom_call.1} parent=1 // pred_fallthru
      _
    // Predicated region
    $region26: #{tpu_custom_call.1} parent=1 // pred_check
      _
    $region27: #{tpu_custom_call.1} parent=1 // pred_check_branch
      %48 = sbr.rel (0) target = $region29
    $region28: #{tpu_custom_call.1} parent=1 // pred_region
      _
    $region29: #{tpu_custom_call.1} parent=1 // pred_fallthru
      _
    // Predicated region
    $region30: #{tpu_custom_call.1} parent=1 // pred_check
      _
    $region31: #{tpu_custom_call.1} parent=1 // pred_check_branch
      %50 = sbr.rel (0) target = $region33
    $region32: #{tpu_custom_call.1} parent=1 // pred_region
      _
    $region33: #{tpu_custom_call.1} parent=1 // pred_fallthru
      _
    // Predicated region
    $region34: #{tpu_custom_call.1} parent=1 // pred_check
      _
    $region35: #{tpu_custom_call.1} parent=1 // pred_check_branch
      %52 = sbr.rel (0) target = $region37
    $region36: #{tpu_custom_call.1} parent=1 // pred_region
      _
    $region37: #{tpu_custom_call.1} parent=1 // pred_fallthru
      _
    // Predicated region
    $region38: #{tpu_custom_call.1} parent=1 // pred_check
      _
    $region39: #{tpu_custom_call.1} parent=1 // pred_check_branch
      %54 = sbr.rel (0) target = $region41
    $region40: #{tpu_custom_call.1} parent=1 // pred_region
      %55 = dma.done [#allocation3], 6144
    $region41: #{tpu_custom_call.1} parent=1 // pred_fallthru
      _
    // Predicated region
    $region42: #{tpu_custom_call.1} parent=1 // pred_check
      _
    $region43: #{tpu_custom_call.1} parent=1 // pred_check_branch
      %57 = sbr.rel (0) target = $region45
    $region44: #{tpu_custom_call.1} parent=1 // pred_region
      %58 = dma.done [#allocation6], 96
    $region45: #{tpu_custom_call.1} parent=1 // pred_fallthru
      _
    %v60 = vld [vmem:[%s0] sm:$0xff]
    %v61 = vcvt.s32.f32 %v60
    %v62 = vpack.c.bf16 %v61, %v61
    %v63 = vld [vmem:[%s1] sm:$0xf]
    %v64 = vld [vmem:[%s1 + $0x4] sm:$0xf]
    %v65 = vld [vmem:[%s1 + $0x8] sm:$0xf]
    %v66 = vld [vmem:[%s1 + $0xc] sm:$0xf]
    %v67 = vld [vmem:[%s2] sm:$0x1]
    %v69 = vlaneseq
    %v70 = vshrl.u32 %v69, 7
    %v71 = vsub.s32 0, %v70
    %v72 = vrot.slane %v67, %v71
    %v78 = vunpack.c.l.b16 %v63
    %v79 = vunpack.c.l.b16 %v64
    %v80 = vunpack.c.l.b16 %v65
    %v81 = vunpack.c.l.b16 %v66
    %v82 = vpack.c.b16 %v79, %v78
    %v83 = vpack.c.b16 %v81, %v80
    %vm86 = vcmask 261120
    %v88 = vsel %vm86, %v62, 0
    %90 = vmatprep.subr.bf16.mxu0 0
    %91 = vmatpush1.bf16.msra.mxu0 %v82
    %92 = vmatprep.subr.bf16.mxu0 0
    %93 = vmatpush1.bf16.msra.mxu0 %v83
    %94 = vmatprep.subr.bf16.mxu0 0
    %95 = vmatpush1.bf16.msra.mxu0 0
    %96 = vmatprep.subr.bf16.mxu0 0
    %97 = vmatpush1.bf16.msra.mxu0 0
    %98 = vmatprep.subr.bf16.mxu0 0
    %99 = vmatpush1.bf16.msra.mxu0 0
    %100 = vmatprep.subr.bf16.mxu0 0
    %101 = vmatpush1.bf16.msra.mxu0 0
    %102 = vmatprep.subr.bf16.mxu0 0
    %103 = vmatpush1.bf16.msra.mxu0 0
    %104 = vmatprep.subr.bf16.mxu0 0
    %105 = vmatpush1.bf16.msra.mxu0 0
    %106 = vmatprep.subr.bf16.mxu0 0
    %107 = vmatpush1.bf16.msra.mxu0 0
    %108 = vmatprep.subr.bf16.mxu0 0
    %109 = vmatpush1.bf16.msra.mxu0 0
    %110 = vmatprep.subr.bf16.mxu0 0
    %111 = vmatpush1.bf16.msra.mxu0 0
    %112 = vmatprep.subr.bf16.mxu0 0
    %113 = vmatpush1.bf16.msra.mxu0 0
    %114 = vmatprep.subr.bf16.mxu0 0
    %115 = vmatpush1.bf16.msra.mxu0 0
    %116 = vmatprep.subr.bf16.mxu0 0
    %117 = vmatpush1.bf16.msra.mxu0 0
    %118 = vmatprep.subr.bf16.mxu0 0
    %119 = vmatpush1.bf16.msra.mxu0 0
    %120 = vmatprep.subr.bf16.mxu0 0
    %121 = vmatpush1.bf16.msra.mxu0 0
    %122 = vmatprep.mubr.bf16.mxu0 0
    %123 = vmatmul.mubr.bf16.gmra.mrb[0].mxu0 %v88
    %v124 = vpop.f32.mrb[0].mxu0
    %v125 = vadd.f32 %v72, %v124
    %v126 = vpop.f32.mrb[0].mxu0
    %v127 = vpop.f32.mrb[0].mxu0
    %v128 = vpop.f32.mrb[0].mxu0
    %129 = vdwg.mxu0
    %v130 = vmul.f32 %v125, 0.70710677
    %v131 = vand.u32 2147483647, %v130
    %v132 = vmul.f32 %v131, 0.3275911
    %v133 = vadd.f32 %v132, 1.0
    %v134 = vrcp.pop %v133
    %v135 = vmul.f32 1.0, %v134
    %v136 = vmul.f32 %v135, 1.0614054
    %v137 = vsub.f32 %v136, 1.4531521
    %v138 = vmul.f32 %v137, %v135
    %v139 = vadd.f32 %v138, 1.4214138
    %v140 = vmul.f32 %v139, %v135
    %v141 = vsub.f32 %v140, 0.28449672
    %v142 = vmul.f32 %v141, %v135
    %v143 = vadd.f32 %v142, 0.2548296
    %v144 = vmul.f32 %v143, %v135
    %v145 = vsub.f32 0.0, %v131
    %v146 = vmul.f32 %v145, %v131
    %v147 = vmul.f32 %v146, 1.442695
    %v148 = vpow.pop %v147
    %v149 = vmul.f32 %v144, %v148
    %v150 = vsub.f32 1.0, %v149
    %vm151 = vcmp.lt.f32.partialorder %v130, 0.0
    %v152 = vsub.f32 0.0, %v150
    %v153 = vsel %vm151, %v152, %v150
    %v154 = vmul.f32 %v125, 0.5
    %v155 = vadd.f32 %v153, 1.0
    %v156 = vmul.f32 %v154, %v155
    %v157 = vld [vmem:[#allocation2] sm:$0xff]
    %v158 = vld [vmem:[#allocation2 + $0x8] sm:$0xff]
    %v159 = vld [vmem:[#allocation2 + $0x10] sm:$0xff]
    %v160 = vld [vmem:[#allocation2 + $0x18] sm:$0xff]
    %v161 = vld [vmem:[#allocation2 + $0x20] sm:$0xff]
    %v162 = vld [vmem:[#allocation2 + $0x28] sm:$0xff]
    %v163 = vld [vmem:[#allocation2 + $0x30] sm:$0xff]
    %v164 = vld [vmem:[#allocation2 + $0x38] sm:$0xff]
    %v165 = vld [vmem:[#allocation2 + $0x40] sm:$0xff]
    %v166 = vld [vmem:[#allocation2 + $0x48] sm:$0xff]
    %v167 = vld [vmem:[#allocation2 + $0x50] sm:$0xff]
    %v168 = vld [vmem:[#allocation2 + $0x58] sm:$0xff]
    %v169 = vld [vmem:[#allocation2 + $0x60] sm:$0xff]
    %v170 = vld [vmem:[#allocation2 + $0x68] sm:$0xff]
    %v171 = vld [vmem:[#allocation2 + $0x70] sm:$0xff]
    %v172 = vld [vmem:[#allocation2 + $0x78] sm:$0xff]
    %v173 = vld [vmem:[#allocation2 + $0x80] sm:$0xff]
    %v174 = vld [vmem:[#allocation2 + $0x88] sm:$0xff]
    %v175 = vld [vmem:[#allocation2 + $0x90] sm:$0xff]
    %v176 = vld [vmem:[#allocation2 + $0x98] sm:$0xff]
    %v177 = vld [vmem:[#allocation2 + $0xa0] sm:$0xff]
    %v178 = vld [vmem:[#allocation2 + $0xa8] sm:$0xff]
    %v179 = vld [vmem:[#allocation2 + $0xb0] sm:$0xff]
    %v180 = vld [vmem:[#allocation2 + $0xb8] sm:$0xff]
    %v181 = vld [vmem:[#allocation2 + $0xc0] sm:$0xff]
    %v182 = vld [vmem:[#allocation2 + $0xc8] sm:$0xff]
    %v183 = vld [vmem:[#allocation2 + $0xd0] sm:$0xff]
    %v184 = vld [vmem:[#allocation2 + $0xd8] sm:$0xff]
    %v185 = vld [vmem:[#allocation2 + $0xe0] sm:$0xff]
    %v186 = vld [vmem:[#allocation2 + $0xe8] sm:$0xff]
    %v187 = vld [vmem:[#allocation2 + $0xf0] sm:$0xff]
    %v188 = vld [vmem:[#allocation2 + $0xf8] sm:$0xff]
    %v189 = vld [vmem:[#allocation2 + $0x100] sm:$0xff]
    %v190 = vld [vmem:[#allocation2 + $0x108] sm:$0xff]
    %v191 = vld [vmem:[#allocation2 + $0x110] sm:$0xff]
    %v192 = vld [vmem:[#allocation2 + $0x118] sm:$0xff]
    %v193 = vld [vmem:[#allocation2 + $0x120] sm:$0xff]
    %v194 = vld [vmem:[#allocation2 + $0x128] sm:$0xff]
    %v195 = vld [vmem:[#allocation2 + $0x130] sm:$0xff]
    %v196 = vld [vmem:[#allocation2 + $0x138] sm:$0xff]
    %v197 = vld [vmem:[#allocation2 + $0x140] sm:$0xff]
    %v198 = vld [vmem:[#allocation2 + $0x148] sm:$0xff]
    %v199 = vld [vmem:[#allocation2 + $0x150] sm:$0xff]
    %v200 = vld [vmem:[#allocation2 + $0x158] sm:$0xff]
    %v201 = vld [vmem:[#allocation2 + $0x160] sm:$0xff]
    %v202 = vld [vmem:[#allocation2 + $0x168] sm:$0xff]
    %v203 = vld [vmem:[#allocation2 + $0x170] sm:$0xff]
    %v204 = vld [vmem:[#allocation2 + $0x178] sm:$0xff]
    %v205 = vld [vmem:[#allocation5] sm:$0x3f]
    %v206 = vpack.c.bf16 %v156, %v156
    %v208 = vlaneseq
    %v209 = vshrl.u32 %v208, 7
    %v210 = vsub.s32 0, %v209
    %v211 = vrot.slane %v205, %v210
    %v212 = vlaneseq
    %v213 = vshrl.u32 %v212, 7
    %v214 = vsub.s32 1, %v213
    %v215 = vrot.slane %v205, %v214
    %v216 = vlaneseq
    %v217 = vshrl.u32 %v216, 7
    %v218 = vsub.s32 2, %v217
    %v219 = vrot.slane %v205, %v218
    %v220 = vlaneseq
    %v221 = vshrl.u32 %v220, 7
    %v222 = vsub.s32 3, %v221
    %v223 = vrot.slane %v205, %v222
    %v224 = vlaneseq
    %v225 = vshrl.u32 %v224, 7
    %v226 = vsub.s32 4, %v225
    %v227 = vrot.slane %v205, %v226
    %v228 = vlaneseq
    %v229 = vshrl.u32 %v228, 7
    %v230 = vsub.s32 5, %v229
    %v231 = vrot.slane %v205, %v230
    %v286 = vunpack.c.l.b16 %v157
    %v287 = vunpack.c.h.b16 %v157
    %v288 = vunpack.c.l.b16 %v158
    %v289 = vunpack.c.h.b16 %v158
    %v290 = vunpack.c.l.b16 %v159
    %v291 = vunpack.c.h.b16 %v159
    %v292 = vunpack.c.l.b16 %v160
    %v293 = vunpack.c.h.b16 %v160
    %v294 = vunpack.c.l.b16 %v161
    %v295 = vunpack.c.h.b16 %v161
    %v296 = vunpack.c.l.b16 %v162
    %v297 = vunpack.c.h.b16 %v162
    %v298 = vunpack.c.l.b16 %v163
    %v299 = vunpack.c.h.b16 %v163
    %v300 = vunpack.c.l.b16 %v164
    %v301 = vunpack.c.h.b16 %v164
    %v302 = vunpack.c.l.b16 %v165
    %v303 = vunpack.c.h.b16 %v165
    %v304 = vunpack.c.l.b16 %v166
    %v305 = vunpack.c.h.b16 %v166
    %v306 = vunpack.c.l.b16 %v167
    %v307 = vunpack.c.h.b16 %v167
    %v308 = vunpack.c.l.b16 %v168
    %v309 = vunpack.c.h.b16 %v168
    %v310 = vunpack.c.l.b16 %v169
    %v311 = vunpack.c.h.b16 %v169
    %v312 = vunpack.c.l.b16 %v170
    %v313 = vunpack.c.h.b16 %v170
    %v314 = vunpack.c.l.b16 %v171
    %v315 = vunpack.c.h.b16 %v171
    %v316 = vunpack.c.l.b16 %v172
    %v317 = vunpack.c.h.b16 %v172
    %v318 = vunpack.c.l.b16 %v173
    %v319 = vunpack.c.h.b16 %v173
    %v320 = vunpack.c.l.b16 %v174
    %v321 = vunpack.c.h.b16 %v174
    %v322 = vunpack.c.l.b16 %v175
    %v323 = vunpack.c.h.b16 %v175
    %v324 = vunpack.c.l.b16 %v176
    %v325 = vunpack.c.h.b16 %v176
    %v326 = vunpack.c.l.b16 %v177
    %v327 = vunpack.c.h.b16 %v177
    %v328 = vunpack.c.l.b16 %v178
    %v329 = vunpack.c.h.b16 %v178
    %v330 = vunpack.c.l.b16 %v179
    %v331 = vunpack.c.h.b16 %v179
    %v332 = vunpack.c.l.b16 %v180
    %v333 = vunpack.c.h.b16 %v180
    %v334 = vunpack.c.l.b16 %v181
    %v335 = vunpack.c.h.b16 %v181
    %v336 = vunpack.c.l.b16 %v182
    %v337 = vunpack.c.h.b16 %v182
    %v338 = vunpack.c.l.b16 %v183
    %v339 = vunpack.c.h.b16 %v183
    %v340 = vunpack.c.l.b16 %v184
    %v341 = vunpack.c.h.b16 %v184
    %v342 = vunpack.c.l.b16 %v185
    %v343 = vunpack.c.h.b16 %v185
    %v344 = vunpack.c.l.b16 %v186
    %v345 = vunpack.c.h.b16 %v186
    %v346 = vunpack.c.l.b16 %v187
    %v347 = vunpack.c.h.b16 %v187
    %v348 = vunpack.c.l.b16 %v188
    %v349 = vunpack.c.h.b16 %v188
    %v350 = vunpack.c.l.b16 %v189
    %v351 = vunpack.c.h.b16 %v189
    %v352 = vunpack.c.l.b16 %v190
    %v353 = vunpack.c.h.b16 %v190
    %v354 = vunpack.c.l.b16 %v191
    %v355 = vunpack.c.h.b16 %v191
    %v356 = vunpack.c.l.b16 %v192
    %v357 = vunpack.c.h.b16 %v192
    %v358 = vunpack.c.l.b16 %v193
    %v359 = vunpack.c.h.b16 %v193
    %v360 = vunpack.c.l.b16 %v194
    %v361 = vunpack.c.h.b16 %v194
    %v362 = vunpack.c.l.b16 %v195
    %v363 = vunpack.c.h.b16 %v195
    %v364 = vunpack.c.l.b16 %v196
    %v365 = vunpack.c.h.b16 %v196
    %v366 = vunpack.c.l.b16 %v197
    %v367 = vunpack.c.h.b16 %v197
    %v368 = vunpack.c.l.b16 %v198
    %v369 = vunpack.c.h.b16 %v198
    %v370 = vunpack.c.l.b16 %v199
    %v371 = vunpack.c.h.b16 %v199
    %v372 = vunpack.c.l.b16 %v200
    %v373 = vunpack.c.h.b16 %v200
    %v374 = vunpack.c.l.b16 %v201
    %v375 = vunpack.c.h.b16 %v201
    %v376 = vunpack.c.l.b16 %v202
    %v377 = vunpack.c.h.b16 %v202
    %v378 = vunpack.c.l.b16 %v203
    %v379 = vunpack.c.h.b16 %v203
    %v380 = vunpack.c.l.b16 %v204
    %v381 = vunpack.c.h.b16 %v204
    %v382 = vpack.c.b16 %v292, %v286
    %v383 = vpack.c.b16 %v293, %v287
    %v384 = vpack.c.b16 %v294, %v288
    %v385 = vpack.c.b16 %v295, %v289
    %v386 = vpack.c.b16 %v296, %v290
    %v387 = vpack.c.b16 %v297, %v291
    %v388 = vpack.c.b16 %v304, %v298
    %v389 = vpack.c.b16 %v305, %v299
    %v390 = vpack.c.b16 %v306, %v300
    %v391 = vpack.c.b16 %v307, %v301
    %v392 = vpack.c.b16 %v308, %v302
    %v393 = vpack.c.b16 %v309, %v303
    %v394 = vpack.c.b16 %v316, %v310
    %v395 = vpack.c.b16 %v317, %v311
    %v396 = vpack.c.b16 %v318, %v312
    %v397 = vpack.c.b16 %v319, %v313
    %v398 = vpack.c.b16 %v320, %v314
    %v399 = vpack.c.b16 %v321, %v315
    %v400 = vpack.c.b16 %v328, %v322
    %v401 = vpack.c.b16 %v329, %v323
    %v402 = vpack.c.b16 %v330, %v324
    %v403 = vpack.c.b16 %v331, %v325
    %v404 = vpack.c.b16 %v332, %v326
    %v405 = vpack.c.b16 %v333, %v327
    %v406 = vpack.c.b16 %v340, %v334
    %v407 = vpack.c.b16 %v341, %v335
    %v408 = vpack.c.b16 %v342, %v336
    %v409 = vpack.c.b16 %v343, %v337
    %v410 = vpack.c.b16 %v344, %v338
    %v411 = vpack.c.b16 %v345, %v339
    %v412 = vpack.c.b16 %v352, %v346
    %v413 = vpack.c.b16 %v353, %v347
    %v414 = vpack.c.b16 %v354, %v348
    %v415 = vpack.c.b16 %v355, %v349
    %v416 = vpack.c.b16 %v356, %v350
    %v417 = vpack.c.b16 %v357, %v351
    %v418 = vpack.c.b16 %v364, %v358
    %v419 = vpack.c.b16 %v365, %v359
    %v420 = vpack.c.b16 %v366, %v360
    %v421 = vpack.c.b16 %v367, %v361
    %v422 = vpack.c.b16 %v368, %v362
    %v423 = vpack.c.b16 %v369, %v363
    %v424 = vpack.c.b16 %v376, %v370
    %v425 = vpack.c.b16 %v377, %v371
    %v426 = vpack.c.b16 %v378, %v372
    %v427 = vpack.c.b16 %v379, %v373
    %v428 = vpack.c.b16 %v380, %v374
    %v429 = vpack.c.b16 %v381, %v375
    %478 = vmatprep.subr.bf16.mxu0 %v383
    %479 = vmatpush1.bf16.msra.mxu0 %v382
    %480 = vmatprep.subr.bf16.mxu0 %v389
    %481 = vmatpush1.bf16.msra.mxu0 %v388
    %482 = vmatprep.subr.bf16.mxu0 %v395
    %483 = vmatpush1.bf16.msra.mxu0 %v394
    %484 = vmatprep.subr.bf16.mxu0 %v401
    %485 = vmatpush1.bf16.msra.mxu0 %v400
    %486 = vmatprep.subr.bf16.mxu0 %v407
    %487 = vmatpush1.bf16.msra.mxu0 %v406
    %488 = vmatprep.subr.bf16.mxu0 %v413
    %489 = vmatpush1.bf16.msra.mxu0 %v412
    %490 = vmatprep.subr.bf16.mxu0 %v419
    %491 = vmatpush1.bf16.msra.mxu0 %v418
    %492 = vmatprep.subr.bf16.mxu0 %v425
    %493 = vmatpush1.bf16.msra.mxu0 %v424
    %494 = vmatprep.subr.bf16.mxu0 0
    %495 = vmatpush1.bf16.msra.mxu0 0
    %496 = vmatprep.subr.bf16.mxu0 0
    %497 = vmatpush1.bf16.msra.mxu0 0
    %498 = vmatprep.subr.bf16.mxu0 0
    %499 = vmatpush1.bf16.msra.mxu0 0
    %500 = vmatprep.subr.bf16.mxu0 0
    %501 = vmatpush1.bf16.msra.mxu0 0
    %502 = vmatprep.subr.bf16.mxu0 0
    %503 = vmatpush1.bf16.msra.mxu0 0
    %504 = vmatprep.subr.bf16.mxu0 0
    %505 = vmatpush1.bf16.msra.mxu0 0
    %506 = vmatprep.subr.bf16.mxu0 0
    %507 = vmatpush1.bf16.msra.mxu0 0
    %508 = vmatprep.subr.bf16.mxu0 0
    %509 = vmatpush1.bf16.msra.mxu0 0
    %510 = vmatprep.mubr.bf16.mxu0 0
    %511 = vmatmul.mubr.bf16.gmra.mrb[0].mxu0 %v206
    %v512 = vpop.f32.mrb[0].mxu0
    %v513 = vadd.f32 %v211, %v512
    %v514 = vpop.f32.mrb[0].mxu0
    %v515 = vadd.f32 %v215, %v514
    %v516 = vpop.f32.mrb[0].mxu0
    %v517 = vpop.f32.mrb[0].mxu0
    %518 = vdwg.mxu0
    %519 = vmatprep.subr.bf16.mxu0 %v385
    %520 = vmatpush1.bf16.msra.mxu0 %v384
    %521 = vmatprep.subr.bf16.mxu0 %v391
    %522 = vmatpush1.bf16.msra.mxu0 %v390
    %523 = vmatprep.subr.bf16.mxu0 %v397
    %524 = vmatpush1.bf16.msra.mxu0 %v396
    %525 = vmatprep.subr.bf16.mxu0 %v403
    %526 = vmatpush1.bf16.msra.mxu0 %v402
    %527 = vmatprep.subr.bf16.mxu0 %v409
    %528 = vmatpush1.bf16.msra.mxu0 %v408
    %529 = vmatprep.subr.bf16.mxu0 %v415
    %530 = vmatpush1.bf16.msra.mxu0 %v414
    %531 = vmatprep.subr.bf16.mxu0 %v421
    %532 = vmatpush1.bf16.msra.mxu0 %v420
    %533 = vmatprep.subr.bf16.mxu0 %v427
    %534 = vmatpush1.bf16.msra.mxu0 %v426
    %535 = vmatprep.subr.bf16.mxu0 0
    %536 = vmatpush1.bf16.msra.mxu0 0
    %537 = vmatprep.subr.bf16.mxu0 0
    %538 = vmatpush1.bf16.msra.mxu0 0
    %539 = vmatprep.subr.bf16.mxu0 0
    %540 = vmatpush1.bf16.msra.mxu0 0
    %541 = vmatprep.subr.bf16.mxu0 0
    %542 = vmatpush1.bf16.msra.mxu0 0
    %543 = vmatprep.subr.bf16.mxu0 0
    %544 = vmatpush1.bf16.msra.mxu0 0
    %545 = vmatprep.subr.bf16.mxu0 0
    %546 = vmatpush1.bf16.msra.mxu0 0
    %547 = vmatprep.subr.bf16.mxu0 0
    %548 = vmatpush1.bf16.msra.mxu0 0
    %549 = vmatprep.subr.bf16.mxu0 0
    %550 = vmatpush1.bf16.msra.mxu0 0
    %551 = vmatprep.mubr.bf16.mxu0 0
    %552 = vmatmul.mubr.bf16.gmra.mrb[0].mxu0 %v206
    %v553 = vpop.f32.mrb[0].mxu0
    %v554 = vadd.f32 %v219, %v553
    %v555 = vpop.f32.mrb[0].mxu0
    %v556 = vadd.f32 %v223, %v555
    %v557 = vpop.f32.mrb[0].mxu0
    %v558 = vpop.f32.mrb[0].mxu0
    %559 = vdwg.mxu0
    %560 = vmatprep.subr.bf16.mxu0 %v387
    %561 = vmatpush1.bf16.msra.mxu0 %v386
    %562 = vmatprep.subr.bf16.mxu0 %v393
    %563 = vmatpush1.bf16.msra.mxu0 %v392
    %564 = vmatprep.subr.bf16.mxu0 %v399
    %565 = vmatpush1.bf16.msra.mxu0 %v398
    %566 = vmatprep.subr.bf16.mxu0 %v405
    %567 = vmatpush1.bf16.msra.mxu0 %v404
    %568 = vmatprep.subr.bf16.mxu0 %v411
    %569 = vmatpush1.bf16.msra.mxu0 %v410
    %570 = vmatprep.subr.bf16.mxu0 %v417
    %571 = vmatpush1.bf16.msra.mxu0 %v416
    %572 = vmatprep.subr.bf16.mxu0 %v423
    %573 = vmatpush1.bf16.msra.mxu0 %v422
    %574 = vmatprep.subr.bf16.mxu0 %v429
    %575 = vmatpush1.bf16.msra.mxu0 %v428
    %576 = vmatprep.subr.bf16.mxu0 0
    %577 = vmatpush1.bf16.msra.mxu0 0
    %578 = vmatprep.subr.bf16.mxu0 0
    %579 = vmatpush1.bf16.msra.mxu0 0
    %580 = vmatprep.subr.bf16.mxu0 0
    %581 = vmatpush1.bf16.msra.mxu0 0
    %582 = vmatprep.subr.bf16.mxu0 0
    %583 = vmatpush1.bf16.msra.mxu0 0
    %584 = vmatprep.subr.bf16.mxu0 0
    %585 = vmatpush1.bf16.msra.mxu0 0
    %586 = vmatprep.subr.bf16.mxu0 0
    %587 = vmatpush1.bf16.msra.mxu0 0
    %588 = vmatprep.subr.bf16.mxu0 0
    %589 = vmatpush1.bf16.msra.mxu0 0
    %590 = vmatprep.subr.bf16.mxu0 0
    %591 = vmatpush1.bf16.msra.mxu0 0
    %592 = vmatprep.mubr.bf16.mxu0 0
    %593 = vmatmul.mubr.bf16.gmra.mrb[0].mxu0 %v206
    %v594 = vpop.f32.mrb[0].mxu0
    %v595 = vadd.f32 %v227, %v594
    %v596 = vpop.f32.mrb[0].mxu0
    %v597 = vadd.f32 %v231, %v596
    %v598 = vpop.f32.mrb[0].mxu0
    %v599 = vpop.f32.mrb[0].mxu0
    %600 = vdwg.mxu0
    %v602 = vrot.slane %v556, 4
    %v604 = vadd.f32 %v513, %v602
    %v605 = vxor.u32 %v604, 2147483648
    %v606 = vmul.f32 %v605, 1.442695
    %v607 = vpow.pop %v606
    %v608 = vadd.f32 %v607, 1.0
    %v609 = vrcp.pop %v608
    %v610 = vmul.f32 1.0, %v609
    %v612 = vrot.slane %v595, 4
    %v614 = vadd.f32 %v515, %v612
    %v615 = vxor.u32 %v614, 2147483648
    %v616 = vmul.f32 %v615, 1.442695
    %v617 = vpow.pop %v616
    %v618 = vadd.f32 %v617, 1.0
    %v619 = vrcp.pop %v618
    %v620 = vmul.f32 1.0, %v619
    %v622 = vrot.slane %v597, 4
    %v624 = vmul.f32 %v610, %v622
    %v625 = vadd.f32 %v554, %v624
    %v626 = vtanh.pop %v625
    %v628 = vrot.slane %v626, 4
    %v630 = vsub.f32 %v156, %v628
    %v632 = vrot.slane %v630, 4
    %v634 = vmul.f32 %v620, %v632
    %v635 = vadd.f32 %v626, %v634
    %v637 = vrot.slane %v635, 4
    %v639 = vadd.f32 %v635, %v637
    %v640 = vmul.f32 %v639, 0.5
    %v641 = vpack.c.bf16 %v640, %v640
    %642 = vmatprep.subr.bf16.mxu0 %v383
    %643 = vmatpush1.bf16.msra.mxu0 %v382
    %644 = vmatprep.subr.bf16.mxu0 %v389
    %645 = vmatpush1.bf16.msra.mxu0 %v388
    %646 = vmatprep.subr.bf16.mxu0 %v395
    %647 = vmatpush1.bf16.msra.mxu0 %v394
    %648 = vmatprep.subr.bf16.mxu0 %v401
    %649 = vmatpush1.bf16.msra.mxu0 %v400
    %650 = vmatprep.subr.bf16.mxu0 %v407
    %651 = vmatpush1.bf16.msra.mxu0 %v406
    %652 = vmatprep.subr.bf16.mxu0 %v413
    %653 = vmatpush1.bf16.msra.mxu0 %v412
    %654 = vmatprep.subr.bf16.mxu0 %v419
    %655 = vmatpush1.bf16.msra.mxu0 %v418
    %656 = vmatprep.subr.bf16.mxu0 %v425
    %657 = vmatpush1.bf16.msra.mxu0 %v424
    %658 = vmatprep.subr.bf16.mxu0 0
    %659 = vmatpush1.bf16.msra.mxu0 0
    %660 = vmatprep.subr.bf16.mxu0 0
    %661 = vmatpush1.bf16.msra.mxu0 0
    %662 = vmatprep.subr.bf16.mxu0 0
    %663 = vmatpush1.bf16.msra.mxu0 0
    %664 = vmatprep.subr.bf16.mxu0 0
    %665 = vmatpush1.bf16.msra.mxu0 0
    %666 = vmatprep.subr.bf16.mxu0 0
    %667 = vmatpush1.bf16.msra.mxu0 0
    %668 = vmatprep.subr.bf16.mxu0 0
    %669 = vmatpush1.bf16.msra.mxu0 0
    %670 = vmatprep.subr.bf16.mxu0 0
    %671 = vmatpush1.bf16.msra.mxu0 0
    %672 = vmatprep.subr.bf16.mxu0 0
    %673 = vmatpush1.bf16.msra.mxu0 0
    %674 = vmatprep.mubr.bf16.mxu0 0
    %675 = vmatmul.mubr.bf16.gmra.mrb[0].mxu0 %v641
    %v676 = vpop.f32.mrb[0].mxu0
    %v677 = vadd.f32 %v211, %v676
    %v678 = vpop.f32.mrb[0].mxu0
    %v679 = vadd.f32 %v215, %v678
    %v680 = vpop.f32.mrb[0].mxu0
    %v681 = vpop.f32.mrb[0].mxu0
    %682 = vdwg.mxu0
    %683 = vmatprep.subr.bf16.mxu0 %v385
    %684 = vmatpush1.bf16.msra.mxu0 %v384
    %685 = vmatprep.subr.bf16.mxu0 %v391
    %686 = vmatpush1.bf16.msra.mxu0 %v390
    %687 = vmatprep.subr.bf16.mxu0 %v397
    %688 = vmatpush1.bf16.msra.mxu0 %v396
    %689 = vmatprep.subr.bf16.mxu0 %v403
    %690 = vmatpush1.bf16.msra.mxu0 %v402
    %691 = vmatprep.subr.bf16.mxu0 %v409
    %692 = vmatpush1.bf16.msra.mxu0 %v408
    %693 = vmatprep.subr.bf16.mxu0 %v415
    %694 = vmatpush1.bf16.msra.mxu0 %v414
    %695 = vmatprep.subr.bf16.mxu0 %v421
    %696 = vmatpush1.bf16.msra.mxu0 %v420
    %697 = vmatprep.subr.bf16.mxu0 %v427
    %698 = vmatpush1.bf16.msra.mxu0 %v426
    %699 = vmatprep.subr.bf16.mxu0 0
    %700 = vmatpush1.bf16.msra.mxu0 0
    %701 = vmatprep.subr.bf16.mxu0 0
    %702 = vmatpush1.bf16.msra.mxu0 0
    %703 = vmatprep.subr.bf16.mxu0 0
    %704 = vmatpush1.bf16.msra.mxu0 0
    %705 = vmatprep.subr.bf16.mxu0 0
    %706 = vmatpush1.bf16.msra.mxu0 0
    %707 = vmatprep.subr.bf16.mxu0 0
    %708 = vmatpush1.bf16.msra.mxu0 0
    %709 = vmatprep.subr.bf16.mxu0 0
    %710 = vmatpush1.bf16.msra.mxu0 0
    %711 = vmatprep.subr.bf16.mxu0 0
    %712 = vmatpush1.bf16.msra.mxu0 0
    %713 = vmatprep.subr.bf16.mxu0 0
    %714 = vmatpush1.bf16.msra.mxu0 0
    %715 = vmatprep.mubr.bf16.mxu0 0
    %716 = vmatmul.mubr.bf16.gmra.mrb[0].mxu0 %v641
    %v717 = vpop.f32.mrb[0].mxu0
    %v718 = vadd.f32 %v219, %v717
    %v719 = vpop.f32.mrb[0].mxu0
    %v720 = vadd.f32 %v223, %v719
    %v721 = vpop.f32.mrb[0].mxu0
    %v722 = vpop.f32.mrb[0].mxu0
    %723 = vdwg.mxu0
    %724 = vmatprep.subr.bf16.mxu0 %v387
    %725 = vmatpush1.bf16.msra.mxu0 %v386
    %726 = vmatprep.subr.bf16.mxu0 %v393
    %727 = vmatpush1.bf16.msra.mxu0 %v392
    %728 = vmatprep.subr.bf16.mxu0 %v399
    %729 = vmatpush1.bf16.msra.mxu0 %v398
    %730 = vmatprep.subr.bf16.mxu0 %v405
    %731 = vmatpush1.bf16.msra.mxu0 %v404
    %732 = vmatprep.subr.bf16.mxu0 %v411
    %733 = vmatpush1.bf16.msra.mxu0 %v410
    %734 = vmatprep.subr.bf16.mxu0 %v417
    %735 = vmatpush1.bf16.msra.mxu0 %v416
    %736 = vmatprep.subr.bf16.mxu0 %v423
    %737 = vmatpush1.bf16.msra.mxu0 %v422
    %738 = vmatprep.subr.bf16.mxu0 %v429
    %739 = vmatpush1.bf16.msra.mxu0 %v428
    %740 = vmatprep.subr.bf16.mxu0 0
    %741 = vmatpush1.bf16.msra.mxu0 0
    %742 = vmatprep.subr.bf16.mxu0 0
    %743 = vmatpush1.bf16.msra.mxu0 0
    %744 = vmatprep.subr.bf16.mxu0 0
    %745 = vmatpush1.bf16.msra.mxu0 0
    %746 = vmatprep.subr.bf16.mxu0 0
    %747 = vmatpush1.bf16.msra.mxu0 0
    %748 = vmatprep.subr.bf16.mxu0 0
    %749 = vmatpush1.bf16.msra.mxu0 0
    %750 = vmatprep.subr.bf16.mxu0 0
    %751 = vmatpush1.bf16.msra.mxu0 0
    %752 = vmatprep.subr.bf16.mxu0 0
    %753 = vmatpush1.bf16.msra.mxu0 0
    %754 = vmatprep.subr.bf16.mxu0 0
    %755 = vmatpush1.bf16.msra.mxu0 0
    %756 = vmatprep.mubr.bf16.mxu0 0
    %757 = vmatmul.mubr.bf16.gmra.mrb[0].mxu0 %v641
    %v758 = vpop.f32.mrb[0].mxu0
    %v759 = vadd.f32 %v227, %v758
    %v760 = vpop.f32.mrb[0].mxu0
    %v761 = vadd.f32 %v231, %v760
    %v762 = vpop.f32.mrb[0].mxu0
    %v763 = vpop.f32.mrb[0].mxu0
    %764 = vdwg.mxu0
    %v766 = vrot.slane %v720, 2
    %v768 = vadd.f32 %v677, %v766
    %v769 = vxor.u32 %v768, 2147483648
    %v770 = vmul.f32 %v769, 1.442695
    %v771 = vpow.pop %v770
    %v772 = vadd.f32 %v771, 1.0
    %v773 = vrcp.pop %v772
    %v774 = vmul.f32 1.0, %v773
    %v776 = vrot.slane %v759, 2
    %v778 = vadd.f32 %v679, %v776
    %v779 = vxor.u32 %v778, 2147483648
    %v780 = vmul.f32 %v779, 1.442695
    %v781 = vpow.pop %v780
    %v782 = vadd.f32 %v781, 1.0
    %v783 = vrcp.pop %v782
    %v784 = vmul.f32 1.0, %v783
    %v786 = vrot.slane %v761, 2
    %v788 = vmul.f32 %v774, %v786
    %v789 = vadd.f32 %v718, %v788
    %v790 = vtanh.pop %v789
    %v792 = vrot.slane %v790, 6
    %v794 = vsub.f32 %v640, %v792
    %v796 = vrot.slane %v794, 2
    %v798 = vmul.f32 %v784, %v796
    %v799 = vadd.f32 %v790, %v798
    %v800 = vrot.slane %v720, 6
    %v802 = vadd.f32 %v677, %v800
    %v803 = vxor.u32 %v802, 2147483648
    %v804 = vmul.f32 %v803, 1.442695
    %v805 = vpow.pop %v804
    %v806 = vadd.f32 %v805, 1.0
    %v807 = vrcp.pop %v806
    %v808 = vmul.f32 1.0, %v807
    %v809 = vrot.slane %v759, 6
    %v811 = vadd.f32 %v679, %v809
    %v812 = vxor.u32 %v811, 2147483648
    %v813 = vmul.f32 %v812, 1.442695
    %v814 = vpow.pop %v813
    %v815 = vadd.f32 %v814, 1.0
    %v816 = vrcp.pop %v815
    %v817 = vmul.f32 1.0, %v816
    %v818 = vrot.slane %v761, 6
    %v820 = vmul.f32 %v808, %v818
    %v821 = vadd.f32 %v718, %v820
    %v822 = vtanh.pop %v821
    %v824 = vrot.slane %v822, 2
    %v826 = vsub.f32 %v640, %v824
    %v828 = vrot.slane %v826, 6
    %v830 = vmul.f32 %v817, %v828
    %v831 = vadd.f32 %v822, %v830
    %v833 = vrot.slane %v831, 2
    %v835 = vadd.f32 %v799, %v833
    %v836 = vmul.f32 %v835, 0.5
    %v837 = vpack.c.bf16 %v836, %v836
    %838 = vmatprep.subr.bf16.mxu0 %v383
    %839 = vmatpush1.bf16.msra.mxu0 %v382
    %840 = vmatprep.subr.bf16.mxu0 %v389
    %841 = vmatpush1.bf16.msra.mxu0 %v388
    %842 = vmatprep.subr.bf16.mxu0 %v395
    %843 = vmatpush1.bf16.msra.mxu0 %v394
    %844 = vmatprep.subr.bf16.mxu0 %v401
    %845 = vmatpush1.bf16.msra.mxu0 %v400
    %846 = vmatprep.subr.bf16.mxu0 %v407
    %847 = vmatpush1.bf16.msra.mxu0 %v406
    %848 = vmatprep.subr.bf16.mxu0 %v413
    %849 = vmatpush1.bf16.msra.mxu0 %v412
    %850 = vmatprep.subr.bf16.mxu0 %v419
    %851 = vmatpush1.bf16.msra.mxu0 %v418
    %852 = vmatprep.subr.bf16.mxu0 %v425
    %853 = vmatpush1.bf16.msra.mxu0 %v424
    %854 = vmatprep.subr.bf16.mxu0 0
    %855 = vmatpush1.bf16.msra.mxu0 0
    %856 = vmatprep.subr.bf16.mxu0 0
    %857 = vmatpush1.bf16.msra.mxu0 0
    %858 = vmatprep.subr.bf16.mxu0 0
    %859 = vmatpush1.bf16.msra.mxu0 0
    %860 = vmatprep.subr.bf16.mxu0 0
    %861 = vmatpush1.bf16.msra.mxu0 0
    %862 = vmatprep.subr.bf16.mxu0 0
    %863 = vmatpush1.bf16.msra.mxu0 0
    %864 = vmatprep.subr.bf16.mxu0 0
    %865 = vmatpush1.bf16.msra.mxu0 0
    %866 = vmatprep.subr.bf16.mxu0 0
    %867 = vmatpush1.bf16.msra.mxu0 0
    %868 = vmatprep.subr.bf16.mxu0 0
    %869 = vmatpush1.bf16.msra.mxu0 0
    %870 = vmatprep.mubr.bf16.mxu0 0
    %871 = vmatmul.mubr.bf16.gmra.mrb[0].mxu0 %v837
    %v872 = vpop.f32.mrb[0].mxu0
    %v873 = vadd.f32 %v211, %v872
    %v874 = vpop.f32.mrb[0].mxu0
    %v875 = vadd.f32 %v215, %v874
    %v876 = vpop.f32.mrb[0].mxu0
    %v877 = vpop.f32.mrb[0].mxu0
    %878 = vdwg.mxu0
    %879 = vmatprep.subr.bf16.mxu0 %v385
    %880 = vmatpush1.bf16.msra.mxu0 %v384
    %881 = vmatprep.subr.bf16.mxu0 %v391
    %882 = vmatpush1.bf16.msra.mxu0 %v390
    %883 = vmatprep.subr.bf16.mxu0 %v397
    %884 = vmatpush1.bf16.msra.mxu0 %v396
    %885 = vmatprep.subr.bf16.mxu0 %v403
    %886 = vmatpush1.bf16.msra.mxu0 %v402
    %887 = vmatprep.subr.bf16.mxu0 %v409
    %888 = vmatpush1.bf16.msra.mxu0 %v408
    %889 = vmatprep.subr.bf16.mxu0 %v415
    %890 = vmatpush1.bf16.msra.mxu0 %v414
    %891 = vmatprep.subr.bf16.mxu0 %v421
    %892 = vmatpush1.bf16.msra.mxu0 %v420
    %893 = vmatprep.subr.bf16.mxu0 %v427
    %894 = vmatpush1.bf16.msra.mxu0 %v426
    %895 = vmatprep.subr.bf16.mxu0 0
    %896 = vmatpush1.bf16.msra.mxu0 0
    %897 = vmatprep.subr.bf16.mxu0 0
    %898 = vmatpush1.bf16.msra.mxu0 0
    %899 = vmatprep.subr.bf16.mxu0 0
    %900 = vmatpush1.bf16.msra.mxu0 0
    %901 = vmatprep.subr.bf16.mxu0 0
    %902 = vmatpush1.bf16.msra.mxu0 0
    %903 = vmatprep.subr.bf16.mxu0 0
    %904 = vmatpush1.bf16.msra.mxu0 0
    %905 = vmatprep.subr.bf16.mxu0 0
    %906 = vmatpush1.bf16.msra.mxu0 0
    %907 = vmatprep.subr.bf16.mxu0 0
    %908 = vmatpush1.bf16.msra.mxu0 0
    %909 = vmatprep.subr.bf16.mxu0 0
    %910 = vmatpush1.bf16.msra.mxu0 0
    %911 = vmatprep.mubr.bf16.mxu0 0
    %912 = vmatmul.mubr.bf16.gmra.mrb[0].mxu0 %v837
    %v913 = vpop.f32.mrb[0].mxu0
    %v914 = vadd.f32 %v219, %v913
    %v915 = vpop.f32.mrb[0].mxu0
    %v916 = vadd.f32 %v223, %v915
    %v917 = vpop.f32.mrb[0].mxu0
    %v918 = vpop.f32.mrb[0].mxu0
    %919 = vdwg.mxu0
    %920 = vmatprep.subr.bf16.mxu0 %v387
    %921 = vmatpush1.bf16.msra.mxu0 %v386
    %922 = vmatprep.subr.bf16.mxu0 %v393
    %923 = vmatpush1.bf16.msra.mxu0 %v392
    %924 = vmatprep.subr.bf16.mxu0 %v399
    %925 = vmatpush1.bf16.msra.mxu0 %v398
    %926 = vmatprep.subr.bf16.mxu0 %v405
    %927 = vmatpush1.bf16.msra.mxu0 %v404
    %928 = vmatprep.subr.bf16.mxu0 %v411
    %929 = vmatpush1.bf16.msra.mxu0 %v410
    %930 = vmatprep.subr.bf16.mxu0 %v417
    %931 = vmatpush1.bf16.msra.mxu0 %v416
    %932 = vmatprep.subr.bf16.mxu0 %v423
    %933 = vmatpush1.bf16.msra.mxu0 %v422
    %934 = vmatprep.subr.bf16.mxu0 %v429
    %935 = vmatpush1.bf16.msra.mxu0 %v428
    %936 = vmatprep.subr.bf16.mxu0 0
    %937 = vmatpush1.bf16.msra.mxu0 0
    %938 = vmatprep.subr.bf16.mxu0 0
    %939 = vmatpush1.bf16.msra.mxu0 0
    %940 = vmatprep.subr.bf16.mxu0 0
    %941 = vmatpush1.bf16.msra.mxu0 0
    %942 = vmatprep.subr.bf16.mxu0 0
    %943 = vmatpush1.bf16.msra.mxu0 0
    %944 = vmatprep.subr.bf16.mxu0 0
    %945 = vmatpush1.bf16.msra.mxu0 0
    %946 = vmatprep.subr.bf16.mxu0 0
    %947 = vmatpush1.bf16.msra.mxu0 0
    %948 = vmatprep.subr.bf16.mxu0 0
    %949 = vmatpush1.bf16.msra.mxu0 0
    %950 = vmatprep.subr.bf16.mxu0 0
    %951 = vmatpush1.bf16.msra.mxu0 0
    %952 = vmatprep.mubr.bf16.mxu0 0
    %953 = vmatmul.mubr.bf16.gmra.mrb[0].mxu0 %v837
    %v954 = vpop.f32.mrb[0].mxu0
    %v955 = vadd.f32 %v227, %v954
    %v956 = vpop.f32.mrb[0].mxu0
    %v957 = vadd.f32 %v231, %v956
    %v958 = vpop.f32.mrb[0].mxu0
    %v959 = vpop.f32.mrb[0].mxu0
    %960 = vdwg.mxu0
    %v962 = vrot.slane %v916, 1
    %v964 = vadd.f32 %v873, %v962
    %v965 = vxor.u32 %v964, 2147483648
    %v966 = vmul.f32 %v965, 1.442695
    %v967 = vpow.pop %v966
    %v968 = vadd.f32 %v967, 1.0
    %v969 = vrcp.pop %v968
    %v970 = vmul.f32 1.0, %v969
    %v972 = vrot.slane %v955, 1
    %v974 = vadd.f32 %v875, %v972
    %v975 = vxor.u32 %v974, 2147483648
    %v976 = vmul.f32 %v975, 1.442695
    %v977 = vpow.pop %v976
    %v978 = vadd.f32 %v977, 1.0
    %v979 = vrcp.pop %v978
    %v980 = vmul.f32 1.0, %v979
    %v982 = vrot.slane %v957, 1
    %v984 = vmul.f32 %v970, %v982
    %v985 = vadd.f32 %v914, %v984
    %v986 = vtanh.pop %v985
    %v988 = vrot.slane %v986, 7
    %v990 = vsub.f32 %v836, %v988
    %v992 = vrot.slane %v990, 1
    %v994 = vmul.f32 %v980, %v992
    %v995 = vadd.f32 %v986, %v994
    %v996 = vrot.slane %v916, 7
    %v998 = vadd.f32 %v873, %v996
    %v999 = vxor.u32 %v998, 2147483648
    %v1000 = vmul.f32 %v999, 1.442695
    %v1001 = vpow.pop %v1000
    %v1002 = vadd.f32 %v1001, 1.0
    %v1003 = vrcp.pop %v1002
    %v1004 = vmul.f32 1.0, %v1003
    %v1005 = vrot.slane %v955, 7
    %v1007 = vadd.f32 %v875, %v1005
    %v1008 = vxor.u32 %v1007, 2147483648
    %v1009 = vmul.f32 %v1008, 1.442695
    %v1010 = vpow.pop %v1009
    %v1011 = vadd.f32 %v1010, 1.0
    %v1012 = vrcp.pop %v1011
    %v1013 = vmul.f32 1.0, %v1012
    %v1014 = vrot.slane %v957, 7
    %v1016 = vmul.f32 %v1004, %v1014
    %v1017 = vadd.f32 %v914, %v1016
    %v1018 = vtanh.pop %v1017
    %v1020 = vrot.slane %v1018, 1
    %v1022 = vsub.f32 %v836, %v1020
    %v1024 = vrot.slane %v1022, 7
    %v1026 = vmul.f32 %v1013, %v1024
    %v1027 = vadd.f32 %v1018, %v1026
    %v1029 = vrot.slane %v1027, 1
    %v1031 = vadd.f32 %v995, %v1029
    %v1032 = vmul.f32 %v1031, 0.5
    %v1033 = vpack.c.bf16 %v1032, %v1032
    %v1034 = vld [vmem:[%s5] sm:$0xf]
    %v1035 = vld [vmem:[%s5 + $0x4] sm:$0xf]
    %v1036 = vld [vmem:[%s5 + $0x8] sm:$0xf]
    %v1037 = vld [vmem:[%s5 + $0xc] sm:$0xf]
    %v1038 = vld [vmem:[%s5 + $0x10] sm:$0xf]
    %v1039 = vld [vmem:[%s5 + $0x14] sm:$0xf]
    %v1040 = vld [vmem:[%s5 + $0x18] sm:$0xf]
    %v1041 = vld [vmem:[%s5 + $0x1c] sm:$0xf]
    %v1042 = vld [vmem:[%s5 + $0x20] sm:$0xf]
    %v1043 = vld [vmem:[%s5 + $0x24] sm:$0xf]
    %v1044 = vld [vmem:[%s5 + $0x28] sm:$0xf]
    %v1045 = vld [vmem:[%s5 + $0x2c] sm:$0xf]
    %v1046 = vld [vmem:[%s5 + $0x30] sm:$0xf]
    %v1047 = vld [vmem:[%s5 + $0x34] sm:$0xf]
    %v1048 = vld [vmem:[%s5 + $0x38] sm:$0xf]
    %v1049 = vld [vmem:[%s5 + $0x3c] sm:$0xf]
    %v1050 = vld [vmem:[%s6] sm:$0x1]
    %v1067 = vunpack.c.l.b16 %v1034
    %v1068 = vunpack.c.l.b16 %v1035
    %v1069 = vunpack.c.l.b16 %v1036
    %v1070 = vunpack.c.l.b16 %v1037
    %v1071 = vunpack.c.l.b16 %v1038
    %v1072 = vunpack.c.l.b16 %v1039
    %v1073 = vunpack.c.l.b16 %v1040
    %v1074 = vunpack.c.l.b16 %v1041
    %v1075 = vunpack.c.l.b16 %v1042
    %v1076 = vunpack.c.l.b16 %v1043
    %v1077 = vunpack.c.l.b16 %v1044
    %v1078 = vunpack.c.l.b16 %v1045
    %v1079 = vunpack.c.l.b16 %v1046
    %v1080 = vunpack.c.l.b16 %v1047
    %v1081 = vunpack.c.l.b16 %v1048
    %v1082 = vunpack.c.l.b16 %v1049
    %v1083 = vpack.c.b16 %v1068, %v1067
    %v1084 = vpack.c.b16 %v1070, %v1069
    %v1085 = vpack.c.b16 %v1072, %v1071
    %v1086 = vpack.c.b16 %v1074, %v1073
    %v1087 = vpack.c.b16 %v1076, %v1075
    %v1088 = vpack.c.b16 %v1078, %v1077
    %v1089 = vpack.c.b16 %v1080, %v1079
    %v1090 = vpack.c.b16 %v1082, %v1081
    %1099 = vmatprep.subr.bf16.mxu0 0
    %1100 = vmatpush1.bf16.msra.mxu0 %v1083
    %1101 = vmatprep.subr.bf16.mxu0 0
    %1102 = vmatpush1.bf16.msra.mxu0 %v1084
    %1103 = vmatprep.subr.bf16.mxu0 0
    %1104 = vmatpush1.bf16.msra.mxu0 %v1085
    %1105 = vmatprep.subr.bf16.mxu0 0
    %1106 = vmatpush1.bf16.msra.mxu0 %v1086
    %1107 = vmatprep.subr.bf16.mxu0 0
    %1108 = vmatpush1.bf16.msra.mxu0 %v1087
    %1109 = vmatprep.subr.bf16.mxu0 0
    %1110 = vmatpush1.bf16.msra.mxu0 %v1088
    %1111 = vmatprep.subr.bf16.mxu0 0
    %1112 = vmatpush1.bf16.msra.mxu0 %v1089
    %1113 = vmatprep.subr.bf16.mxu0 0
    %1114 = vmatpush1.bf16.msra.mxu0 %v1090
    %1115 = vmatprep.subr.bf16.mxu0 0
    %1116 = vmatpush1.bf16.msra.mxu0 0
    %1117 = vmatprep.subr.bf16.mxu0 0
    %1118 = vmatpush1.bf16.msra.mxu0 0
    %1119 = vmatprep.subr.bf16.mxu0 0
    %1120 = vmatpush1.bf16.msra.mxu0 0
    %1121 = vmatprep.subr.bf16.mxu0 0
    %1122 = vmatpush1.bf16.msra.mxu0 0
    %1123 = vmatprep.subr.bf16.mxu0 0
    %1124 = vmatpush1.bf16.msra.mxu0 0
    %1125 = vmatprep.subr.bf16.mxu0 0
    %1126 = vmatpush1.bf16.msra.mxu0 0
    %1127 = vmatprep.subr.bf16.mxu0 0
    %1128 = vmatpush1.bf16.msra.mxu0 0
    %1129 = vmatprep.subr.bf16.mxu0 0
    %1130 = vmatpush1.bf16.msra.mxu0 0
    %1131 = vmatprep.mubr.bf16.mxu0 0
    %1132 = vmatmul.mubr.bf16.gmra.mrb[0].mxu0 %v1033
    %v1133 = vpop.f32.mrb[0].mxu0
    %v1134 = vadd.f32 %v1050, %v1133
    %v1135 = vpop.f32.mrb[0].mxu0
    %v1136 = vpop.f32.mrb[0].mxu0
    %v1137 = vpop.f32.mrb[0].mxu0
    %1138 = vdwg.mxu0
    %v1139 = vmul.f32 %v1134, 0.70710677
    %v1140 = vand.u32 2147483647, %v1139
    %v1141 = vmul.f32 %v1140, 0.3275911
    %v1142 = vadd.f32 %v1141, 1.0
    %v1143 = vrcp.pop %v1142
    %v1144 = vmul.f32 1.0, %v1143
    %v1145 = vmul.f32 %v1144, 1.0614054
    %v1146 = vsub.f32 %v1145, 1.4531521
    %v1147 = vmul.f32 %v1146, %v1144
    %v1148 = vadd.f32 %v1147, 1.4214138
    %v1149 = vmul.f32 %v1148, %v1144
    %v1150 = vsub.f32 %v1149, 0.28449672
    %v1151 = vmul.f32 %v1150, %v1144
    %v1152 = vadd.f32 %v1151, 0.2548296
    %v1153 = vmul.f32 %v1152, %v1144
    %v1154 = vsub.f32 0.0, %v1140
    %v1155 = vmul.f32 %v1154, %v1140
    %v1156 = vmul.f32 %v1155, 1.442695
    %v1157 = vpow.pop %v1156
    %v1158 = vmul.f32 %v1153, %v1157
    %v1159 = vsub.f32 1.0, %v1158
    %vm1160 = vcmp.lt.f32.partialorder %v1139, 0.0
    %v1161 = vsub.f32 0.0, %v1159
    %v1162 = vsel %vm1160, %v1161, %v1159
    %v1163 = vmul.f32 %v1134, 0.5
    %v1164 = vadd.f32 %v1162, 1.0
    %v1165 = vmul.f32 %v1163, %v1164
    %v1166 = vpack.c.bf16 %v1165, %v1165
    %v1167 = vld [vmem:[%s7] sm:$0xf]
    %v1168 = vld [vmem:[%s7 + $0x4] sm:$0xf]
    %v1169 = vld [vmem:[%s7 + $0x8] sm:$0xf]
    %v1170 = vld [vmem:[%s7 + $0xc] sm:$0xf]
    %v1171 = vld [vmem:[%s7 + $0x10] sm:$0xf]
    %v1172 = vld [vmem:[%s7 + $0x14] sm:$0xf]
    %v1173 = vld [vmem:[%s7 + $0x18] sm:$0xf]
    %v1174 = vld [vmem:[%s7 + $0x1c] sm:$0xf]
    %v1175 = vld [vmem:[%s7 + $0x20] sm:$0xf]
    %v1176 = vld [vmem:[%s7 + $0x24] sm:$0xf]
    %v1177 = vld [vmem:[%s7 + $0x28] sm:$0xf]
    %v1178 = vld [vmem:[%s7 + $0x2c] sm:$0xf]
    %v1179 = vld [vmem:[%s7 + $0x30] sm:$0xf]
    %v1180 = vld [vmem:[%s7 + $0x34] sm:$0xf]
    %v1181 = vld [vmem:[%s7 + $0x38] sm:$0xf]
    %v1182 = vld [vmem:[%s7 + $0x3c] sm:$0xf]
    %v1183 = vld [vmem:[%s8] sm:$0x1]
    %v1200 = vunpack.c.l.b16 %v1167
    %v1201 = vunpack.c.l.b16 %v1168
    %v1202 = vunpack.c.l.b16 %v1169
    %v1203 = vunpack.c.l.b16 %v1170
    %v1204 = vunpack.c.l.b16 %v1171
    %v1205 = vunpack.c.l.b16 %v1172
    %v1206 = vunpack.c.l.b16 %v1173
    %v1207 = vunpack.c.l.b16 %v1174
    %v1208 = vunpack.c.l.b16 %v1175
    %v1209 = vunpack.c.l.b16 %v1176
    %v1210 = vunpack.c.l.b16 %v1177
    %v1211 = vunpack.c.l.b16 %v1178
    %v1212 = vunpack.c.l.b16 %v1179
    %v1213 = vunpack.c.l.b16 %v1180
    %v1214 = vunpack.c.l.b16 %v1181
    %v1215 = vunpack.c.l.b16 %v1182
    %v1216 = vpack.c.b16 %v1201, %v1200
    %v1217 = vpack.c.b16 %v1203, %v1202
    %v1218 = vpack.c.b16 %v1205, %v1204
    %v1219 = vpack.c.b16 %v1207, %v1206
    %v1220 = vpack.c.b16 %v1209, %v1208
    %v1221 = vpack.c.b16 %v1211, %v1210
    %v1222 = vpack.c.b16 %v1213, %v1212
    %v1223 = vpack.c.b16 %v1215, %v1214
    %1232 = vmatprep.subr.bf16.mxu0 0
    %1233 = vmatpush1.bf16.msra.mxu0 %v1216
    %1234 = vmatprep.subr.bf16.mxu0 0
    %1235 = vmatpush1.bf16.msra.mxu0 %v1217
    %1236 = vmatprep.subr.bf16.mxu0 0
    %1237 = vmatpush1.bf16.msra.mxu0 %v1218
    %1238 = vmatprep.subr.bf16.mxu0 0
    %1239 = vmatpush1.bf16.msra.mxu0 %v1219
    %1240 = vmatprep.subr.bf16.mxu0 0
    %1241 = vmatpush1.bf16.msra.mxu0 %v1220
    %1242 = vmatprep.subr.bf16.mxu0 0
    %1243 = vmatpush1.bf16.msra.mxu0 %v1221
    %1244 = vmatprep.subr.bf16.mxu0 0
    %1245 = vmatpush1.bf16.msra.mxu0 %v1222
    %1246 = vmatprep.subr.bf16.mxu0 0
    %1247 = vmatpush1.bf16.msra.mxu0 %v1223
    %1248 = vmatprep.subr.bf16.mxu0 0
    %1249 = vmatpush1.bf16.msra.mxu0 0
    %1250 = vmatprep.subr.bf16.mxu0 0
    %1251 = vmatpush1.bf16.msra.mxu0 0
    %1252 = vmatprep.subr.bf16.mxu0 0
    %1253 = vmatpush1.bf16.msra.mxu0 0
    %1254 = vmatprep.subr.bf16.mxu0 0
    %1255 = vmatpush1.bf16.msra.mxu0 0
    %1256 = vmatprep.subr.bf16.mxu0 0
    %1257 = vmatpush1.bf16.msra.mxu0 0
    %1258 = vmatprep.subr.bf16.mxu0 0
    %1259 = vmatpush1.bf16.msra.mxu0 0
    %1260 = vmatprep.subr.bf16.mxu0 0
    %1261 = vmatpush1.bf16.msra.mxu0 0
    %1262 = vmatprep.subr.bf16.mxu0 0
    %1263 = vmatpush1.bf16.msra.mxu0 0
    %1264 = vmatprep.mubr.bf16.mxu0 0
    %1265 = vmatmul.mubr.bf16.gmra.mrb[0].mxu0 %v1166
    %v1266 = vpop.f32.mrb[0].mxu0
    %v1267 = vadd.f32 %v1183, %v1266
    %v1268 = vpop.f32.mrb[0].mxu0
    %v1269 = vpop.f32.mrb[0].mxu0
    %v1270 = vpop.f32.mrb[0].mxu0
    %1271 = vdwg.mxu0
    %vm1272 = vcmask 253952
    %1273 = vst.msk [vmem:[#allocation7] sm:$0x1] %vm1272, %v1267
    // Predicated region
    $region46: #{tpu_custom_call.1} parent=1 // pred_check
      _
    $region47: #{tpu_custom_call.1} parent=1 // pred_check_branch
      %1275 = sbr.rel (0) target = $region49
    $region48: #{tpu_custom_call.1} parent=1 // pred_region
      %s1277 = ssub.s32 16, 16
      %1278 = vsyncadd [#allocation4], %s1277
      %s1280 = sshll.u32 [#allocation7], 4
      %s1281 = int_to_ptr.vmem [resolvable:$true] %s1280
      %1283 = dma.vmem_to_hbm [thread:$0]  %s1281, 16, %s9, [#allocation4]
    $region49: #{tpu_custom_call.1} parent=1 // pred_fallthru
      _
    // Predicated region
    $region50: #{tpu_custom_call.1} parent=1 // pred_check
      _
    $region51: #{tpu_custom_call.1} parent=1 // pred_check_branch
      %1285 = sbr.rel (0) target = $region53
    $region52: #{tpu_custom_call.1} parent=1 // pred_region
      %1286 = dma.done [#allocation4], 16
    $region53: #{tpu_custom_call.1} parent=1 // pred_fallthru
      _
    %1287 = vsyncpa [#allocation3], 1
    %1288 = vsyncpa [#allocation6], 1
    %1289 = vsyncpa [#allocation4], 1

</llo_original>
